<compile_context>
chip_gen: v7x
topology: tpu7x:2x2x1
jax: 0.10.0
libtpu: 0.0.40
codegen_flags: <defaults>
</compile_context>

<pallas_src>
import functools

import jax
import jax.numpy as jnp
from jax import lax
from jax.experimental import pallas as pl
from jax.experimental.pallas import tpu as pltpu


# ----------------------------------------------------------------------------
# Generic projection kernel:  out = sum_k x[k] @ w[k] + bias
# Used for (a) the merged both-direction input projection of each LSTM layer
# and (b) the final FC (consuming the two direction halves with row-split
# weights, which removes the explicit bidirectional concat).
# ----------------------------------------------------------------------------
def _proj_kernel(x_ref, w_ref, b_ref, o_ref):
    D = x_ref.shape[0]
    acc = jnp.dot(x_ref[0], w_ref[0], preferred_element_type=jnp.float32)
    for k in range(1, D):
        acc = acc + jnp.dot(x_ref[k], w_ref[k], preferred_element_type=jnp.float32)
    o_ref[...] = (acc + b_ref[...]).astype(o_ref.dtype)


def projection(x_dnf, w_dfm, bias, out_dtype, row_tile=512):
    """x_dnf: (D, N, F) bf16; w_dfm: (D, F, M) bf16; bias: (1, M) f32 -> (N, M)."""
    D, N, F = x_dnf.shape
    M = w_dfm.shape[2]
    bn = N if N <= row_tile else row_tile
    return pl.pallas_call(
        _proj_kernel,
        grid=(pl.cdiv(N, bn),),
        in_specs=[
            pl.BlockSpec((D, bn, F), lambda i: (0, i, 0)),
            pl.BlockSpec((D, F, M), lambda i: (0, 0, 0)),
            pl.BlockSpec((1, M), lambda i: (0, 0)),
        ],
        out_specs=pl.BlockSpec((bn, M), lambda i: (i, 0)),
        out_shape=jax.ShapeDtypeStruct((N, M), out_dtype),
        compiler_params=pltpu.CompilerParams(dimension_semantics=("parallel",)),
    )(x_dnf, w_dfm, bias)


# ----------------------------------------------------------------------------
# Recurrent kernel.  Grid = (direction, time_chunk).  Each grid step processes
# one time chunk of one direction; gx / out are streamed chunk-by-chunk through
# VMEM by the BlockSpec pipeline.  PyTorch gate order: i, f, g, o.
# ----------------------------------------------------------------------------
def _lstm_seq_kernel(gx_ref, whh_ref, out_ref, h_sc, c_sc):
    tc, B, G = gx_ref.shape          # chunk_len, batch, 4H
    H = h_sc.shape[1]
    d = pl.program_id(0)             # 0 = forward, 1 = backward
    chunk = pl.program_id(1)         # chunk index (direction-reversed by index_map)

    @pl.when(chunk == 0)
    def _():
        h_sc[...] = jnp.zeros_like(h_sc)
        c_sc[...] = jnp.zeros_like(c_sc)

    whh = whh_ref[...]               # (H, 4H) bf16, resident across the chunk

    def step(s, carry):
        # forward: t = s ; backward: t = tc - 1 - s   (branch-free integer form)
        t = s + d * (tc - 1 - 2 * s)
        gates = gx_ref[t].astype(jnp.float32) + jnp.dot(
            h_sc[...].astype(jnp.bfloat16), whh,
            preferred_element_type=jnp.float32)             # (B, 4H) f32
        sg = jax.nn.sigmoid(gates)                           # lane-dense over all gates
        i = sg[:, 0 * H:1 * H]
        f = sg[:, 1 * H:2 * H]
        o = sg[:, 3 * H:4 * H]
        g = jnp.tanh(gates[:, 2 * H:3 * H])
        c_new = f * c_sc[...] + i * g
        h_new = o * jnp.tanh(c_new)
        c_sc[...] = c_new
        h_sc[...] = h_new
        out_ref[t] = h_new.astype(out_ref.dtype)
        return carry

    lax.fori_loop(0, tc, step, 0, unroll=min(tc, 8))


def _time_chunk(T, max_chunk=32):
    tc = min(T, max_chunk)
    while T % tc:
        tc -= 1
    return tc


def lstm_bidir_layer(x_dnf, lp, T, B, H):
    """One bidirectional LSTM layer.

    x_dnf: (D, T*B, F) bf16 inputs to the input projection (D=1 for the
    embedding layer, D=2 for a previous bidirectional layer's two halves).
    Returns (2, T, B, H) bf16 hidden states (dir 0 = forward, dir 1 = backward).
    """
    G = 4 * H
    N = T * B

    # Hoisted, merged (both-direction) input projection; gx stored bf16.
    gx = projection(x_dnf, lp["w_in"], lp["bias"], jnp.bfloat16)   # (N, 8H)
    gx = gx.reshape(T, B, 2 * G)           # free reshape; [..., :G]=fwd, [..., G:]=bwd

    tc = _time_chunk(T)
    nc = T // tc

    # TODO(synk): on v7x, pin the two directions onto the two TensorCores with
    # dimension_semantics=(pltpu.CORE_PARALLEL, "arbitrary"); kept "parallel"
    # here so the same script also runs on single-TC v5e/v6e.
    return pl.pallas_call(
        _lstm_seq_kernel,
        grid=(2, nc),
        in_specs=[
            # gx chunk: backward direction walks chunks in reverse time order.
            pl.BlockSpec((tc, B, G),
                         lambda d, c: (c + d * (nc - 1 - 2 * c), 0, d)),
            pl.BlockSpec((None, H, G), lambda d, c: (d, 0, 0)),
        ],
        out_specs=pl.BlockSpec((None, tc, B, H),
                               lambda d, c: (d, c + d * (nc - 1 - 2 * c), 0, 0)),
        out_shape=jax.ShapeDtypeStruct((2, T, B, H), jnp.bfloat16),
        scratch_shapes=[
            pltpu.VMEM((B, H), jnp.float32),   # h state
            pltpu.VMEM((B, H), jnp.float32),   # c state
        ],
        compiler_params=pltpu.CompilerParams(
            dimension_semantics=("parallel", "arbitrary")),
    )(gx, lp["whh"])


# ----------------------------------------------------------------------------
# Full Net forward.
# ----------------------------------------------------------------------------
def net_forward(ids, prepared, *, output_dim):
    """ids: (B, T) int32 token indices -> (B, T, output_dim) float32."""
    B, T = ids.shape
    N = T * B
    H = prepared["layers"][0]["whh"].shape[1]

    # Embedding gather directly into time-major bf16 layout (only the tiny int
    # index array is transposed, not float activations).
    x = jnp.take(prepared["embedding"], ids.T, axis=0)        # (T, B, E) bf16
    x_dnf = x.reshape(1, N, -1)

    for lp in prepared["layers"]:
        h_dirs = lstm_bidir_layer(x_dnf, lp, T, B, H)         # (2, T, B, H) bf16
        x_dnf = h_dirs.reshape(2, N, H)                       # concat-free handoff
        # TODO(synk): nn.LSTM inter-layer dropout (p=0.5) is training-only; skipped (eval).

    # FC with row-split weights over the two direction halves; lane-dense
    # 128-padded output, sliced back to output_dim in the wrapper.
    out_pad = projection(x_dnf, prepared["fc_w"], prepared["fc_b"], jnp.float32)
    out = out_pad[:, :output_dim].reshape(T, B, output_dim)
    return jnp.transpose(out, (1, 0, 2))                      # (B, T, O)


# ----------------------------------------------------------------------------
# Parameter handling: PyTorch-layout f32 params -> kernel-ready bf16 layouts.
# ----------------------------------------------------------------------------
def prepare_params(params, hidden_dim, output_dim):
    H, G = hidden_dim, 4 * hidden_dim
    prepared = {"embedding": params["embedding"].astype(jnp.bfloat16), "layers": []}
    for li, p in enumerate(params["lstm"]):
        F = p["w_ih"].shape[1]
        w_cat = jnp.concatenate([p["w_ih"].T, p["w_ih_r"].T], axis=1)   # (F, 8H)
        if li == 0:
            w_in = w_cat.reshape(1, F, 2 * G)
        else:
            # Row-split so the (2, N, H) direction-major activations can be
            # consumed without ever materializing the (N, 2H) concat.
            w_in = w_cat.reshape(2, H, 2 * G)
        prepared["layers"].append({
            "w_in": w_in.astype(jnp.bfloat16),
            "whh": jnp.stack([p["w_hh"].T, p["w_hh_r"].T]).astype(jnp.bfloat16),  # (2,H,4H)
            "bias": jnp.concatenate(
                [p["b_ih"] + p["b_hh"], p["b_ih_r"] + p["b_hh_r"]]
            ).reshape(1, 2 * G).astype(jnp.float32),
        })
    o_pad = ((output_dim + 127) // 128) * 128
    wfc = jnp.zeros((2 * H, o_pad), jnp.float32).at[:, :output_dim].set(params["fc_w"].T)
    prepared["fc_w"] = wfc.reshape(2, H, o_pad).astype(jnp.bfloat16)
    prepared["fc_b"] = jnp.zeros((1, o_pad), jnp.float32).at[0, :output_dim].set(params["fc_b"])
    return prepared


def init_params(key, vocab_size, embedding_dim, hidden_dim, output_dim):
    keys = iter(jax.random.split(key, 32))

    def u(shape, scale=0.1):
        return jax.random.uniform(next(keys), shape, jnp.float32, -scale, scale)

    params = {"embedding": u((vocab_size, embedding_dim), 1.0), "lstm": []}
    in_sizes = [embedding_dim, 2 * hidden_dim]
    for layer in range(2):
        F = in_sizes[layer]
        params["lstm"].append({
            "w_ih":   u((4 * hidden_dim, F)),
            "w_hh":   u((4 * hidden_dim, hidden_dim)),
            "b_ih":   u((4 * hidden_dim,)),
            "b_hh":   u((4 * hidden_dim,)),
            "w_ih_r": u((4 * hidden_dim, F)),
            "w_hh_r": u((4 * hidden_dim, hidden_dim)),
            "b_ih_r": u((4 * hidden_dim,)),
            "b_hh_r": u((4 * hidden_dim,)),
        })
    params["fc_w"] = u((output_dim, 2 * hidden_dim))
    params["fc_b"] = u((output_dim,))
    return params


# ----------------------------------------------------------------------------
# Pure-JAX f32 reference (PyTorch eval semantics) for a tolerance check.
# ----------------------------------------------------------------------------
def _lstm_dir_ref(xs, w_ih, w_hh, b_ih, b_hh, H):
    B = xs.shape[1]

    def step(carry, x_t):
        h, c = carry
        gates = x_t @ w_ih.T + h @ w_hh.T + b_ih + b_hh
        i = jax.nn.sigmoid(gates[:, 0 * H:1 * H])
        f = jax.nn.sigmoid(gates[:, 1 * H:2 * H])
        g = jnp.tanh(gates[:, 2 * H:3 * H])
        o = jax.nn.sigmoid(gates[:, 3 * H:4 * H])
        c = f * c + i * g
        h = o * jnp.tanh(c)
        return (h, c), h

    init = (jnp.zeros((B, H), jnp.float32), jnp.zeros((B, H), jnp.float32))
    _, hs = lax.scan(step, init, xs)
    return hs


def net_reference(ids, params, hidden_dim):
    H = hidden_dim
    x = jnp.take(params["embedding"], ids.T, axis=0)           # (T, B, E)
    for p in params["lstm"]:
        h_f = _lstm_dir_ref(x, p["w_ih"], p["w_hh"], p["b_ih"], p["b_hh"], H)
        h_b = _lstm_dir_ref(x[::-1], p["w_ih_r"], p["w_hh_r"],
                            p["b_ih_r"], p["b_hh_r"], H)[::-1]
        x = jnp.concatenate([h_f, h_b], axis=-1)
    out = x @ params["fc_w"].T + params["fc_b"]
    return jnp.transpose(out, (1, 0, 2))


if __name__ == "__main__":
    vocab_size, embedding_dim, hidden_dim, output_dim = 32, 16, 32, 8
    batch, seq = 2, 8

    key = jax.random.PRNGKey(0)
    k_params, k_ids = jax.random.split(key)
    params = init_params(k_params, vocab_size, embedding_dim, hidden_dim, output_dim)
    ids = jax.random.randint(k_ids, (batch, seq), 0, vocab_size, dtype=jnp.int32)

    prepared = prepare_params(params, hidden_dim, output_dim)
    fwd = jax.jit(functools.partial(net_forward, output_dim=output_dim))

    out = fwd(ids, prepared)
    jax.block_until_ready(out)

    assert out.shape == (batch, seq, output_dim), out.shape
    assert bool(jnp.all(jnp.isfinite(out)))

    ref = net_reference(ids, params, hidden_dim)
    max_err = float(jnp.max(jnp.abs(out - ref)))
    assert max_err < 5e-2, f"max abs error vs f32 reference: {max_err}"

    print("KERNEL_OK")
</pallas_src>

<mosaic_0001>
module attributes {stable_mosaic.version = 11 : i64} {
  func.func @_proj_kernel(%arg0: i32, %arg1: memref<1x16x16xbf16, #tpu.memory_space<vmem>>, %arg2: memref<1x16x256xbf16, #tpu.memory_space<vmem>>, %arg3: memref<1x256xf32, #tpu.memory_space<vmem>>, %arg4: memref<16x256xbf16, #tpu.memory_space<vmem>>) attributes {dimension_semantics = [#tpu.dimension_semantics<parallel>], iteration_bounds = array<i64: 1>, scalar_prefetch = 0 : i64, scratch_operands = 0 : i64, tpu.core_type = #tpu.core_type<tc>, window_params = [{transform_indices = @transform_0, window_bounds = array<i64: 1, 16, 16>}, {pipeline_mode = #tpu.pipeline_mode<synchronous>, transform_indices = @transform_1, window_bounds = array<i64: 1, 16, 256>}, {pipeline_mode = #tpu.pipeline_mode<synchronous>, transform_indices = @transform_2, window_bounds = array<i64: 1, 256>}, {transform_indices = @transform_3, window_bounds = array<i64: 16, 256>}]} {
    %c0 = arith.constant 0 : index
    %c0_0 = arith.constant 0 : index
    %c0_1 = arith.constant 0 : index
    %0 = vector.load %arg1[%c0, %c0_0, %c0_1] : memref<1x16x16xbf16, #tpu.memory_space<vmem>>, vector<1x16x16xbf16>
    %1 = vector.shape_cast %0 : vector<1x16x16xbf16> to vector<16x16xbf16>
    %c0_2 = arith.constant 0 : index
    %c0_3 = arith.constant 0 : index
    %c0_4 = arith.constant 0 : index
    %2 = vector.load %arg2[%c0_2, %c0_3, %c0_4] : memref<1x16x256xbf16, #tpu.memory_space<vmem>>, vector<1x16x256xbf16>
    %3 = vector.shape_cast %2 : vector<1x16x256xbf16> to vector<16x256xbf16>
    %cst = arith.constant dense<0.000000e+00> : vector<16x256xf32>
    %4 = tpu.matmul %1, %3, %cst {dimension_numbers = #tpu.dot_dimension_numbers<[1], [0], [0], [1], [0, 0, 1, 1], [], []>} : vector<16x16xbf16>, vector<16x256xbf16>, vector<16x256xf32> -> vector<16x256xf32>
    %c0_5 = arith.constant 0 : index
    %c0_6 = arith.constant 0 : index
    %5 = vector.load %arg3[%c0_5, %c0_6] : memref<1x256xf32, #tpu.memory_space<vmem>>, vector<1x256xf32>
    %6 = vector.broadcast %5 : vector<1x256xf32> to vector<16x256xf32>
    %7 = arith.addf %4, %6 : vector<16x256xf32>
    %8 = arith.truncf %7 : vector<16x256xf32> to vector<16x256xbf16>
    %c0_7 = arith.constant 0 : index
    %c0_8 = arith.constant 0 : index
    %9 = vector.load %arg4[%c0_7, %c0_8] : memref<16x256xbf16, #tpu.memory_space<vmem>>, vector<16x256xbf16>
    tpu.vector_store %arg4[%c0_7, %c0_8], %8 {strides = array<i32>} : memref<16x256xbf16, #tpu.memory_space<vmem>>, vector<16x256xbf16>,
    return
  }
  func.func @transform_0(%arg0: i32) -> (i32, i32, i32) {
    %c0_i32 = arith.constant 0 : i32
    %c0_i32_0 = arith.constant 0 : i32
    %c0_i32_1 = arith.constant 0 : i32
    return %c0_i32, %arg0, %c0_i32_0 : i32, i32, i32
  }
  func.func @transform_1(%arg0: i32) -> (i32, i32, i32) {
    %c0_i32 = arith.constant 0 : i32
    %c0_i32_0 = arith.constant 0 : i32
    %c0_i32_1 = arith.constant 0 : i32
    %c0_i32_2 = arith.constant 0 : i32
    return %c0_i32, %c0_i32_0, %c0_i32_1 : i32, i32, i32
  }
  func.func @transform_2(%arg0: i32) -> (i32, i32) {
    %c0_i32 = arith.constant 0 : i32
    %c0_i32_0 = arith.constant 0 : i32
    %c0_i32_1 = arith.constant 0 : i32
    return %c0_i32, %c0_i32_0 : i32, i32
  }
  func.func @transform_3(%arg0: i32) -> (i32, i32) {
    %c0_i32 = arith.constant 0 : i32
    %c0_i32_0 = arith.constant 0 : i32
    return %arg0, %c0_i32 : i32, i32
  }
}

module attributes {stable_mosaic.version = 11 : i64} {
  func.func @_proj_kernel(%arg0: i32, %arg1: memref<2x16x32xbf16, #tpu.memory_space<vmem>>, %arg2: memref<2x32x256xbf16, #tpu.memory_space<vmem>>, %arg3: memref<1x256xf32, #tpu.memory_space<vmem>>, %arg4: memref<16x256xbf16, #tpu.memory_space<vmem>>) attributes {dimension_semantics = [#tpu.dimension_semantics<parallel>], iteration_bounds = array<i64: 1>, scalar_prefetch = 0 : i64, scratch_operands = 0 : i64, tpu.core_type = #tpu.core_type<tc>, window_params = [{transform_indices = @transform_0, window_bounds = array<i64: 2, 16, 32>}, {pipeline_mode = #tpu.pipeline_mode<synchronous>, transform_indices = @transform_1, window_bounds = array<i64: 2, 32, 256>}, {pipeline_mode = #tpu.pipeline_mode<synchronous>, transform_indices = @transform_2, window_bounds = array<i64: 1, 256>}, {transform_indices = @transform_3, window_bounds = array<i64: 16, 256>}]} {
    %c0 = arith.constant 0 : index
    %c0_0 = arith.constant 0 : index
    %c0_1 = arith.constant 0 : index
    %0 = vector.load %arg1[%c0, %c0_0, %c0_1] : memref<2x16x32xbf16, #tpu.memory_space<vmem>>, vector<1x16x32xbf16>
    %1 = vector.shape_cast %0 : vector<1x16x32xbf16> to vector<16x32xbf16>
    %c0_2 = arith.constant 0 : index
    %c0_3 = arith.constant 0 : index
    %c0_4 = arith.constant 0 : index
    %2 = vector.load %arg2[%c0_2, %c0_3, %c0_4] : memref<2x32x256xbf16, #tpu.memory_space<vmem>>, vector<1x32x256xbf16>
    %3 = vector.shape_cast %2 : vector<1x32x256xbf16> to vector<32x256xbf16>
    %cst = arith.constant dense<0.000000e+00> : vector<16x256xf32>
    %4 = tpu.matmul %1, %3, %cst {dimension_numbers = #tpu.dot_dimension_numbers<[1], [0], [0], [1], [0, 0, 1, 1], [], []>} : vector<16x32xbf16>, vector<32x256xbf16>, vector<16x256xf32> -> vector<16x256xf32>
    %c1 = arith.constant 1 : index
    %c0_5 = arith.constant 0 : index
    %c0_6 = arith.constant 0 : index
    %5 = vector.load %arg1[%c1, %c0_5, %c0_6] : memref<2x16x32xbf16, #tpu.memory_space<vmem>>, vector<1x16x32xbf16>
    %6 = vector.shape_cast %5 : vector<1x16x32xbf16> to vector<16x32xbf16>
    %c1_7 = arith.constant 1 : index
    %c0_8 = arith.constant 0 : index
    %c0_9 = arith.constant 0 : index
    %7 = vector.load %arg2[%c1_7, %c0_8, %c0_9] : memref<2x32x256xbf16, #tpu.memory_space<vmem>>, vector<1x32x256xbf16>
    %8 = vector.shape_cast %7 : vector<1x32x256xbf16> to vector<32x256xbf16>
    %cst_10 = arith.constant dense<0.000000e+00> : vector<16x256xf32>
    %9 = tpu.matmul %6, %8, %cst_10 {dimension_numbers = #tpu.dot_dimension_numbers<[1], [0], [0], [1], [0, 0, 1, 1], [], []>} : vector<16x32xbf16>, vector<32x256xbf16>, vector<16x256xf32> -> vector<16x256xf32>
    %10 = arith.addf %4, %9 : vector<16x256xf32>
    %c0_11 = arith.constant 0 : index
    %c0_12 = arith.constant 0 : index
    %11 = vector.load %arg3[%c0_11, %c0_12] : memref<1x256xf32, #tpu.memory_space<vmem>>, vector<1x256xf32>
    %12 = vector.broadcast %11 : vector<1x256xf32> to vector<16x256xf32>
    %13 = arith.addf %10, %12 : vector<16x256xf32>
    %14 = arith.truncf %13 : vector<16x256xf32> to vector<16x256xbf16>
    %c0_13 = arith.constant 0 : index
    %c0_14 = arith.constant 0 : index
    %15 = vector.load %arg4[%c0_13, %c0_14] : memref<16x256xbf16, #tpu.memory_space<vmem>>, vector<16x256xbf16>
    tpu.vector_store %arg4[%c0_13, %c0_14], %14 {strides = array<i32>} : memref<16x256xbf16, #tpu.memory_space<vmem>>, vector<16x256xbf16>,
    return
  }
  func.func @transform_0(%arg0: i32) -> (i32, i32, i32) {
    %c0_i32 = arith.constant 0 : i32
    %c0_i32_0 = arith.constant 0 : i32
    %c0_i32_1 = arith.constant 0 : i32
    return %c0_i32, %arg0, %c0_i32_0 : i32, i32, i32
  }
  func.func @transform_1(%arg0: i32) -> (i32, i32, i32) {
    %c0_i32 = arith.constant 0 : i32
    %c0_i32_0 = arith.constant 0 : i32
    %c0_i32_1 = arith.constant 0 : i32
    %c0_i32_2 = arith.constant 0 : i32
    return %c0_i32, %c0_i32_0, %c0_i32_1 : i32, i32, i32
  }
  func.func @transform_2(%arg0: i32) -> (i32, i32) {
    %c0_i32 = arith.constant 0 : i32
    %c0_i32_0 = arith.constant 0 : i32
    %c0_i32_1 = arith.constant 0 : i32
    return %c0_i32, %c0_i32_0 : i32, i32
  }
  func.func @transform_3(%arg0: i32) -> (i32, i32) {
    %c0_i32 = arith.constant 0 : i32
    %c0_i32_0 = arith.constant 0 : i32
    return %arg0, %c0_i32 : i32, i32
  }
}

module attributes {stable_mosaic.version = 11 : i64} {
  func.func @_proj_kernel(%arg0: i32, %arg1: memref<2x16x32xbf16, #tpu.memory_space<vmem>>, %arg2: memref<2x32x128xbf16, #tpu.memory_space<vmem>>, %arg3: memref<1x128xf32, #tpu.memory_space<vmem>>, %arg4: memref<16x128xf32, #tpu.memory_space<vmem>>) attributes {dimension_semantics = [#tpu.dimension_semantics<parallel>], iteration_bounds = array<i64: 1>, scalar_prefetch = 0 : i64, scratch_operands = 0 : i64, tpu.core_type = #tpu.core_type<tc>, window_params = [{transform_indices = @transform_0, window_bounds = array<i64: 2, 16, 32>}, {pipeline_mode = #tpu.pipeline_mode<synchronous>, transform_indices = @transform_1, window_bounds = array<i64: 2, 32, 128>}, {pipeline_mode = #tpu.pipeline_mode<synchronous>, transform_indices = @transform_2, window_bounds = array<i64: 1, 128>}, {transform_indices = @transform_3, window_bounds = array<i64: 16, 128>}]} {
    %c0 = arith.constant 0 : index
    %c0_0 = arith.constant 0 : index
    %c0_1 = arith.constant 0 : index
    %0 = vector.load %arg1[%c0, %c0_0, %c0_1] : memref<2x16x32xbf16, #tpu.memory_space<vmem>>, vector<1x16x32xbf16>
    %1 = vector.shape_cast %0 : vector<1x16x32xbf16> to vector<16x32xbf16>
    %c0_2 = arith.constant 0 : index
    %c0_3 = arith.constant 0 : index
    %c0_4 = arith.constant 0 : index
    %2 = vector.load %arg2[%c0_2, %c0_3, %c0_4] : memref<2x32x128xbf16, #tpu.memory_space<vmem>>, vector<1x32x128xbf16>
    %3 = vector.shape_cast %2 : vector<1x32x128xbf16> to vector<32x128xbf16>
    %cst = arith.constant dense<0.000000e+00> : vector<16x128xf32>
    %4 = tpu.matmul %1, %3, %cst {dimension_numbers = #tpu.dot_dimension_numbers<[1], [0], [0], [1], [0, 0, 1, 1], [], []>} : vector<16x32xbf16>, vector<32x128xbf16>, vector<16x128xf32> -> vector<16x128xf32>
    %c1 = arith.constant 1 : index
    %c0_5 = arith.constant 0 : index
    %c0_6 = arith.constant 0 : index
    %5 = vector.load %arg1[%c1, %c0_5, %c0_6] : memref<2x16x32xbf16, #tpu.memory_space<vmem>>, vector<1x16x32xbf16>
    %6 = vector.shape_cast %5 : vector<1x16x32xbf16> to vector<16x32xbf16>
    %c1_7 = arith.constant 1 : index
    %c0_8 = arith.constant 0 : index
    %c0_9 = arith.constant 0 : index
    %7 = vector.load %arg2[%c1_7, %c0_8, %c0_9] : memref<2x32x128xbf16, #tpu.memory_space<vmem>>, vector<1x32x128xbf16>
    %8 = vector.shape_cast %7 : vector<1x32x128xbf16> to vector<32x128xbf16>
    %cst_10 = arith.constant dense<0.000000e+00> : vector<16x128xf32>
    %9 = tpu.matmul %6, %8, %cst_10 {dimension_numbers = #tpu.dot_dimension_numbers<[1], [0], [0], [1], [0, 0, 1, 1], [], []>} : vector<16x32xbf16>, vector<32x128xbf16>, vector<16x128xf32> -> vector<16x128xf32>
    %10 = arith.addf %4, %9 : vector<16x128xf32>
    %c0_11 = arith.constant 0 : index
    %c0_12 = arith.constant 0 : index
    %11 = vector.load %arg3[%c0_11, %c0_12] : memref<1x128xf32, #tpu.memory_space<vmem>>, vector<1x128xf32>
    %12 = vector.broadcast %11 : vector<1x128xf32> to vector<16x128xf32>
    %13 = arith.addf %10, %12 : vector<16x128xf32>
    %c0_13 = arith.constant 0 : index
    %c0_14 = arith.constant 0 : index
    %14 = vector.load %arg4[%c0_13, %c0_14] : memref<16x128xf32, #tpu.memory_space<vmem>>, vector<16x128xf32>
    tpu.vector_store %arg4[%c0_13, %c0_14], %13 {strides = array<i32>} : memref<16x128xf32, #tpu.memory_space<vmem>>, vector<16x128xf32>,
    return
  }
  func.func @transform_0(%arg0: i32) -> (i32, i32, i32) {
    %c0_i32 = arith.constant 0 : i32
    %c0_i32_0 = arith.constant 0 : i32
    %c0_i32_1 = arith.constant 0 : i32
    return %c0_i32, %arg0, %c0_i32_0 : i32, i32, i32
  }
  func.func @transform_1(%arg0: i32) -> (i32, i32, i32) {
    %c0_i32 = arith.constant 0 : i32
    %c0_i32_0 = arith.constant 0 : i32
    %c0_i32_1 = arith.constant 0 : i32
    %c0_i32_2 = arith.constant 0 : i32
    return %c0_i32, %c0_i32_0, %c0_i32_1 : i32, i32, i32
  }
  func.func @transform_2(%arg0: i32) -> (i32, i32) {
    %c0_i32 = arith.constant 0 : i32
    %c0_i32_0 = arith.constant 0 : i32
    %c0_i32_1 = arith.constant 0 : i32
    return %c0_i32, %c0_i32_0 : i32, i32
  }
  func.func @transform_3(%arg0: i32) -> (i32, i32) {
    %c0_i32 = arith.constant 0 : i32
    %c0_i32_0 = arith.constant 0 : i32
    return %arg0, %c0_i32 : i32, i32
  }
}

module attributes {stable_mosaic.version = 11 : i64} {
  func.func @_lstm_seq_kernel(%arg0: i32, %arg1: i32, %arg2: memref<8x2x128xbf16, #tpu.memory_space<vmem>>, %arg3: memref<1x32x128xbf16, #tpu.memory_space<vmem>>, %arg4: memref<1x8x2x32xbf16, #tpu.memory_space<vmem>>, %arg5: memref<2x32xf32, #tpu.memory_space<vmem>>, %arg6: memref<2x32xf32, #tpu.memory_space<vmem>>) attributes {dimension_semantics = [#tpu.dimension_semantics<parallel>, #tpu.dimension_semantics<arbitrary>], iteration_bounds = array<i64: 2, 1>, scalar_prefetch = 0 : i64, scratch_operands = 2 : i64, tpu.core_type = #tpu.core_type<tc>, window_params = [{transform_indices = @transform_0, window_bounds = array<i64: 8, 2, 128>}, {transform_indices = @transform_1, window_bounds = array<i64: 1, 32, 128>}, {transform_indices = @transform_2, window_bounds = array<i64: 1, 8, 2, 32>}]} {
    %c0_i32 = arith.constant 0 : i32
    %0 = arith.cmpi eq, %arg1, %c0_i32 : i32
    %1 = arith.extui %0 : i1 to i32
    %c0_i32_0 = arith.constant 0 : i32
    %2 = arith.cmpi ne, %1, %c0_i32_0 : i32
    scf.if %2 {
      %cst_139 = arith.constant 0.000000e+00 : f32
      %285 = vector.broadcast %cst_139 : f32 to vector<2x32xf32>
      %c0_140 = arith.constant 0 : index
      %c0_141 = arith.constant 0 : index
      %286 = vector.load %arg5[%c0_140, %c0_141] : memref<2x32xf32, #tpu.memory_space<vmem>>, vector<2x32xf32>
      tpu.vector_store %arg5[%c0_140, %c0_141], %285 {strides = array<i32>} : memref<2x32xf32, #tpu.memory_space<vmem>>, vector<2x32xf32>,
      %cst_142 = arith.constant 0.000000e+00 : f32
      %287 = vector.broadcast %cst_142 : f32 to vector<2x32xf32>
      %c0_143 = arith.constant 0 : index
      %c0_144 = arith.constant 0 : index
      %288 = vector.load %arg6[%c0_143, %c0_144] : memref<2x32xf32, #tpu.memory_space<vmem>>, vector<2x32xf32>
      tpu.vector_store %arg6[%c0_143, %c0_144], %287 {strides = array<i32>} : memref<2x32xf32, #tpu.memory_space<vmem>>, vector<2x32xf32>,
    } else {
    }
    %c0 = arith.constant 0 : index
    %c0_1 = arith.constant 0 : index
    %c0_2 = arith.constant 0 : index
    %3 = vector.load %arg3[%c0, %c0_1, %c0_2] : memref<1x32x128xbf16, #tpu.memory_space<vmem>>, vector<1x32x128xbf16>
    %4 = vector.shape_cast %3 : vector<1x32x128xbf16> to vector<32x128xbf16>
    %c0_i32_3 = arith.constant 0 : i32
    %c2_i32 = arith.constant 2 : i32
    %5 = arith.muli %c2_i32, %c0_i32_3 : i32
    %c7_i32 = arith.constant 7 : i32
    %6 = arith.subi %c7_i32, %5 : i32
    %7 = arith.muli %arg0, %6 : i32
    %8 = arith.addi %c0_i32_3, %7 : i32
    %9 = arith.index_cast %8 : i32 to index
    %c0_4 = arith.constant 0 : index
    %c0_5 = arith.constant 0 : index
    %10 = vector.load %arg2[%9, %c0_4, %c0_5] : memref<8x2x128xbf16, #tpu.memory_space<vmem>>, vector<1x2x128xbf16>
    %11 = vector.shape_cast %10 : vector<1x2x128xbf16> to vector<2x128xbf16>
    %12 = arith.extf %11 : vector<2x128xbf16> to vector<2x128xf32>
    %c0_6 = arith.constant 0 : index
    %c0_7 = arith.constant 0 : index
    %13 = vector.load %arg5[%c0_6, %c0_7] : memref<2x32xf32, #tpu.memory_space<vmem>>, vector<2x32xf32>
    %14 = arith.truncf %13 : vector<2x32xf32> to vector<2x32xbf16>
    %cst = arith.constant dense<0.000000e+00> : vector<2x128xf32>
    %15 = tpu.matmul %14, %4, %cst {dimension_numbers = #tpu.dot_dimension_numbers<[1], [0], [0], [1], [0, 0, 1, 1], [], []>} : vector<2x32xbf16>, vector<32x128xbf16>, vector<2x128xf32> -> vector<2x128xf32>
    %16 = arith.addf %12, %15 : vector<2x128xf32>
    %17 = arith.negf %16 : vector<2x128xf32>
    %18 = math.exp %17 : vector<2x128xf32>
    %cst_8 = arith.constant 1.000000e+00 : f32
    %19 = vector.broadcast %cst_8 : f32 to vector<2x128xf32>
    %20 = arith.addf %19, %18 : vector<2x128xf32>
    %21 = arith.divf %19, %20 : vector<2x128xf32>
    %22 = vector.extract_strided_slice %21 {offsets = [0, 0], sizes = [2, 32], strides = [1, 1]} : vector<2x128xf32> to vector<2x32xf32>
    %23 = vector.extract_strided_slice %21 {offsets = [0, 32], sizes = [2, 32], strides = [1, 1]} : vector<2x128xf32> to vector<2x32xf32>
    %24 = vector.extract_strided_slice %21 {offsets = [0, 96], sizes = [2, 32], strides = [1, 1]} : vector<2x128xf32> to vector<2x32xf32>
    %25 = vector.extract_strided_slice %16 {offsets = [0, 64], sizes = [2, 32], strides = [1, 1]} : vector<2x128xf32> to vector<2x32xf32>
    %26 = math.tanh %25 : vector<2x32xf32>
    %c0_9 = arith.constant 0 : index
    %c0_10 = arith.constant 0 : index
    %27 = vector.load %arg6[%c0_9, %c0_10] : memref<2x32xf32, #tpu.memory_space<vmem>>, vector<2x32xf32>
    %28 = arith.mulf %23, %27 : vector<2x32xf32>
    %29 = arith.mulf %22, %26 : vector<2x32xf32>
    %30 = arith.addf %28, %29 : vector<2x32xf32>
    %31 = math.tanh %30 : vector<2x32xf32>
    %32 = arith.mulf %24, %31 : vector<2x32xf32>
    %c0_11 = arith.constant 0 : index
    %c0_12 = arith.constant 0 : index
    %33 = vector.load %arg6[%c0_11, %c0_12] : memref<2x32xf32, #tpu.memory_space<vmem>>, vector<2x32xf32>
    tpu.vector_store %arg6[%c0_11, %c0_12], %30 {strides = array<i32>} : memref<2x32xf32, #tpu.memory_space<vmem>>, vector<2x32xf32>,
    %c0_13 = arith.constant 0 : index
    %c0_14 = arith.constant 0 : index
    %34 = vector.load %arg5[%c0_13, %c0_14] : memref<2x32xf32, #tpu.memory_space<vmem>>, vector<2x32xf32>
    tpu.vector_store %arg5[%c0_13, %c0_14], %32 {strides = array<i32>} : memref<2x32xf32, #tpu.memory_space<vmem>>, vector<2x32xf32>,
    %35 = arith.truncf %32 : vector<2x32xf32> to vector<2x32xbf16>
    %c0_15 = arith.constant 0 : index
    %36 = arith.index_cast %8 : i32 to index
    %c0_16 = arith.constant 0 : index
    %c0_17 = arith.constant 0 : index
    %37 = vector.load %arg4[%c0_15, %36, %c0_16, %c0_17] : memref<1x8x2x32xbf16, #tpu.memory_space<vmem>>, vector<1x1x2x32xbf16>
    %38 = vector.shape_cast %37 : vector<1x1x2x32xbf16> to vector<2x32xbf16>
    %39 = vector.shape_cast %35 : vector<2x32xbf16> to vector<1x1x2x32xbf16>
    tpu.vector_store %arg4[%c0_15, %36, %c0_16, %c0_17], %39 {strides = array<i32>} : memref<1x8x2x32xbf16, #tpu.memory_space<vmem>>, vector<1x1x2x32xbf16>,
    %c1_i32 = arith.constant 1 : i32
    %c2_i32_18 = arith.constant 2 : i32
    %40 = arith.muli %c2_i32_18, %c1_i32 : i32
    %c7_i32_19 = arith.constant 7 : i32
    %41 = arith.subi %c7_i32_19, %40 : i32
    %42 = arith.muli %arg0, %41 : i32
    %43 = arith.addi %c1_i32, %42 : i32
    %44 = arith.index_cast %43 : i32 to index
    %c0_20 = arith.constant 0 : index
    %c0_21 = arith.constant 0 : index
    %45 = vector.load %arg2[%44, %c0_20, %c0_21] : memref<8x2x128xbf16, #tpu.memory_space<vmem>>, vector<1x2x128xbf16>
    %46 = vector.shape_cast %45 : vector<1x2x128xbf16> to vector<2x128xbf16>
    %47 = arith.extf %46 : vector<2x128xbf16> to vector<2x128xf32>
    %c0_22 = arith.constant 0 : index
    %c0_23 = arith.constant 0 : index
    %48 = vector.load %arg5[%c0_22, %c0_23] : memref<2x32xf32, #tpu.memory_space<vmem>>, vector<2x32xf32>
    %49 = arith.truncf %48 : vector<2x32xf32> to vector<2x32xbf16>
    %cst_24 = arith.constant dense<0.000000e+00> : vector<2x128xf32>
    %50 = tpu.matmul %49, %4, %cst_24 {dimension_numbers = #tpu.dot_dimension_numbers<[1], [0], [0], [1], [0, 0, 1, 1], [], []>} : vector<2x32xbf16>, vector<32x128xbf16>, vector<2x128xf32> -> vector<2x128xf32>
    %51 = arith.addf %47, %50 : vector<2x128xf32>
    %52 = arith.negf %51 : vector<2x128xf32>
    %53 = math.exp %52 : vector<2x128xf32>
    %cst_25 = arith.constant 1.000000e+00 : f32
    %54 = vector.broadcast %cst_25 : f32 to vector<2x128xf32>
    %55 = arith.addf %54, %53 : vector<2x128xf32>
    %56 = arith.divf %54, %55 : vector<2x128xf32>
    %57 = vector.extract_strided_slice %56 {offsets = [0, 0], sizes = [2, 32], strides = [1, 1]} : vector<2x128xf32> to vector<2x32xf32>
    %58 = vector.extract_strided_slice %56 {offsets = [0, 32], sizes = [2, 32], strides = [1, 1]} : vector<2x128xf32> to vector<2x32xf32>
    %59 = vector.extract_strided_slice %56 {offsets = [0, 96], sizes = [2, 32], strides = [1, 1]} : vector<2x128xf32> to vector<2x32xf32>
    %60 = vector.extract_strided_slice %51 {offsets = [0, 64], sizes = [2, 32], strides = [1, 1]} : vector<2x128xf32> to vector<2x32xf32>
    %61 = math.tanh %60 : vector<2x32xf32>
    %c0_26 = arith.constant 0 : index
    %c0_27 = arith.constant 0 : index
    %62 = vector.load %arg6[%c0_26, %c0_27] : memref<2x32xf32, #tpu.memory_space<vmem>>, vector<2x32xf32>
    %63 = arith.mulf %58, %62 : vector<2x32xf32>
    %64 = arith.mulf %57, %61 : vector<2x32xf32>
    %65 = arith.addf %63, %64 : vector<2x32xf32>
    %66 = math.tanh %65 : vector<2x32xf32>
    %67 = arith.mulf %59, %66 : vector<2x32xf32>
    %c0_28 = arith.constant 0 : index
    %c0_29 = arith.constant 0 : index
    %68 = vector.load %arg6[%c0_28, %c0_29] : memref<2x32xf32, #tpu.memory_space<vmem>>, vector<2x32xf32>
    tpu.vector_store %arg6[%c0_28, %c0_29], %65 {strides = array<i32>} : memref<2x32xf32, #tpu.memory_space<vmem>>, vector<2x32xf32>,
    %c0_30 = arith.constant 0 : index
    %c0_31 = arith.constant 0 : index
    %69 = vector.load %arg5[%c0_30, %c0_31] : memref<2x32xf32, #tpu.memory_space<vmem>>, vector<2x32xf32>
    tpu.vector_store %arg5[%c0_30, %c0_31], %67 {strides = array<i32>} : memref<2x32xf32, #tpu.memory_space<vmem>>, vector<2x32xf32>,
    %70 = arith.truncf %67 : vector<2x32xf32> to vector<2x32xbf16>
    %c0_32 = arith.constant 0 : index
    %71 = arith.index_cast %43 : i32 to index
    %c0_33 = arith.constant 0 : index
    %c0_34 = arith.constant 0 : index
    %72 = vector.load %arg4[%c0_32, %71, %c0_33, %c0_34] : memref<1x8x2x32xbf16, #tpu.memory_space<vmem>>, vector<1x1x2x32xbf16>
    %73 = vector.shape_cast %72 : vector<1x1x2x32xbf16> to vector<2x32xbf16>
    %74 = vector.shape_cast %70 : vector<2x32xbf16> to vector<1x1x2x32xbf16>
    tpu.vector_store %arg4[%c0_32, %71, %c0_33, %c0_34], %74 {strides = array<i32>} : memref<1x8x2x32xbf16, #tpu.memory_space<vmem>>, vector<1x1x2x32xbf16>,
    %c2_i32_35 = arith.constant 2 : i32
    %c2_i32_36 = arith.constant 2 : i32
    %75 = arith.muli %c2_i32_36, %c2_i32_35 : i32
    %c7_i32_37 = arith.constant 7 : i32
    %76 = arith.subi %c7_i32_37, %75 : i32
    %77 = arith.muli %arg0, %76 : i32
    %78 = arith.addi %c2_i32_35, %77 : i32
    %79 = arith.index_cast %78 : i32 to index
    %c0_38 = arith.constant 0 : index
    %c0_39 = arith.constant 0 : index
    %80 = vector.load %arg2[%79, %c0_38, %c0_39] : memref<8x2x128xbf16, #tpu.memory_space<vmem>>, vector<1x2x128xbf16>
    %81 = vector.shape_cast %80 : vector<1x2x128xbf16> to vector<2x128xbf16>
    %82 = arith.extf %81 : vector<2x128xbf16> to vector<2x128xf32>
    %c0_40 = arith.constant 0 : index
    %c0_41 = arith.constant 0 : index
    %83 = vector.load %arg5[%c0_40, %c0_41] : memref<2x32xf32, #tpu.memory_space<vmem>>, vector<2x32xf32>
    %84 = arith.truncf %83 : vector<2x32xf32> to vector<2x32xbf16>
    %cst_42 = arith.constant dense<0.000000e+00> : vector<2x128xf32>
    %85 = tpu.matmul %84, %4, %cst_42 {dimension_numbers = #tpu.dot_dimension_numbers<[1], [0], [0], [1], [0, 0, 1, 1], [], []>} : vector<2x32xbf16>, vector<32x128xbf16>, vector<2x128xf32> -> vector<2x128xf32>
    %86 = arith.addf %82, %85 : vector<2x128xf32>
    %87 = arith.negf %86 : vector<2x128xf32>
    %88 = math.exp %87 : vector<2x128xf32>
    %cst_43 = arith.constant 1.000000e+00 : f32
    %89 = vector.broadcast %cst_43 : f32 to vector<2x128xf32>
    %90 = arith.addf %89, %88 : vector<2x128xf32>
    %91 = arith.divf %89, %90 : vector<2x128xf32>
    %92 = vector.extract_strided_slice %91 {offsets = [0, 0], sizes = [2, 32], strides = [1, 1]} : vector<2x128xf32> to vector<2x32xf32>
    %93 = vector.extract_strided_slice %91 {offsets = [0, 32], sizes = [2, 32], strides = [1, 1]} : vector<2x128xf32> to vector<2x32xf32>
    %94 = vector.extract_strided_slice %91 {offsets = [0, 96], sizes = [2, 32], strides = [1, 1]} : vector<2x128xf32> to vector<2x32xf32>
    %95 = vector.extract_strided_slice %86 {offsets = [0, 64], sizes = [2, 32], strides = [1, 1]} : vector<2x128xf32> to vector<2x32xf32>
    %96 = math.tanh %95 : vector<2x32xf32>
    %c0_44 = arith.constant 0 : index
    %c0_45 = arith.constant 0 : index
    %97 = vector.load %arg6[%c0_44, %c0_45] : memref<2x32xf32, #tpu.memory_space<vmem>>, vector<2x32xf32>
    %98 = arith.mulf %93, %97 : vector<2x32xf32>
    %99 = arith.mulf %92, %96 : vector<2x32xf32>
    %100 = arith.addf %98, %99 : vector<2x32xf32>
    %101 = math.tanh %100 : vector<2x32xf32>
    %102 = arith.mulf %94, %101 : vector<2x32xf32>
    %c0_46 = arith.constant 0 : index
    %c0_47 = arith.constant 0 : index
    %103 = vector.load %arg6[%c0_46, %c0_47] : memref<2x32xf32, #tpu.memory_space<vmem>>, vector<2x32xf32>
    tpu.vector_store %arg6[%c0_46, %c0_47], %100 {strides = array<i32>} : memref<2x32xf32, #tpu.memory_space<vmem>>, vector<2x32xf32>,
    %c0_48 = arith.constant 0 : index
    %c0_49 = arith.constant 0 : index
    %104 = vector.load %arg5[%c0_48, %c0_49] : memref<2x32xf32, #tpu.memory_space<vmem>>, vector<2x32xf32>
    tpu.vector_store %arg5[%c0_48, %c0_49], %102 {strides = array<i32>} : memref<2x32xf32, #tpu.memory_space<vmem>>, vector<2x32xf32>,
    %105 = arith.truncf %102 : vector<2x32xf32> to vector<2x32xbf16>
    %c0_50 = arith.constant 0 : index
    %106 = arith.index_cast %78 : i32 to index
    %c0_51 = arith.constant 0 : index
    %c0_52 = arith.constant 0 : index
    %107 = vector.load %arg4[%c0_50, %106, %c0_51, %c0_52] : memref<1x8x2x32xbf16, #tpu.memory_space<vmem>>, vector<1x1x2x32xbf16>
    %108 = vector.shape_cast %107 : vector<1x1x2x32xbf16> to vector<2x32xbf16>
    %109 = vector.shape_cast %105 : vector<2x32xbf16> to vector<1x1x2x32xbf16>
    tpu.vector_store %arg4[%c0_50, %106, %c0_51, %c0_52], %109 {strides = array<i32>} : memref<1x8x2x32xbf16, #tpu.memory_space<vmem>>, vector<1x1x2x32xbf16>,
    %c3_i32 = arith.constant 3 : i32
    %c2_i32_53 = arith.constant 2 : i32
    %110 = arith.muli %c2_i32_53, %c3_i32 : i32
    %c7_i32_54 = arith.constant 7 : i32
    %111 = arith.subi %c7_i32_54, %110 : i32
    %112 = arith.muli %arg0, %111 : i32
    %113 = arith.addi %c3_i32, %112 : i32
    %114 = arith.index_cast %113 : i32 to index
    %c0_55 = arith.constant 0 : index
    %c0_56 = arith.constant 0 : index
    %115 = vector.load %arg2[%114, %c0_55, %c0_56] : memref<8x2x128xbf16, #tpu.memory_space<vmem>>, vector<1x2x128xbf16>
    %116 = vector.shape_cast %115 : vector<1x2x128xbf16> to vector<2x128xbf16>
    %117 = arith.extf %116 : vector<2x128xbf16> to vector<2x128xf32>
    %c0_57 = arith.constant 0 : index
    %c0_58 = arith.constant 0 : index
    %118 = vector.load %arg5[%c0_57, %c0_58] : memref<2x32xf32, #tpu.memory_space<vmem>>, vector<2x32xf32>
    %119 = arith.truncf %118 : vector<2x32xf32> to vector<2x32xbf16>
    %cst_59 = arith.constant dense<0.000000e+00> : vector<2x128xf32>
    %120 = tpu.matmul %119, %4, %cst_59 {dimension_numbers = #tpu.dot_dimension_numbers<[1], [0], [0], [1], [0, 0, 1, 1], [], []>} : vector<2x32xbf16>, vector<32x128xbf16>, vector<2x128xf32> -> vector<2x128xf32>
    %121 = arith.addf %117, %120 : vector<2x128xf32>
    %122 = arith.negf %121 : vector<2x128xf32>
    %123 = math.exp %122 : vector<2x128xf32>
    %cst_60 = arith.constant 1.000000e+00 : f32
    %124 = vector.broadcast %cst_60 : f32 to vector<2x128xf32>
    %125 = arith.addf %124, %123 : vector<2x128xf32>
    %126 = arith.divf %124, %125 : vector<2x128xf32>
    %127 = vector.extract_strided_slice %126 {offsets = [0, 0], sizes = [2, 32], strides = [1, 1]} : vector<2x128xf32> to vector<2x32xf32>
    %128 = vector.extract_strided_slice %126 {offsets = [0, 32], sizes = [2, 32], strides = [1, 1]} : vector<2x128xf32> to vector<2x32xf32>
    %129 = vector.extract_strided_slice %126 {offsets = [0, 96], sizes = [2, 32], strides = [1, 1]} : vector<2x128xf32> to vector<2x32xf32>
    %130 = vector.extract_strided_slice %121 {offsets = [0, 64], sizes = [2, 32], strides = [1, 1]} : vector<2x128xf32> to vector<2x32xf32>
    %131 = math.tanh %130 : vector<2x32xf32>
    %c0_61 = arith.constant 0 : index
    %c0_62 = arith.constant 0 : index
    %132 = vector.load %arg6[%c0_61, %c0_62] : memref<2x32xf32, #tpu.memory_space<vmem>>, vector<2x32xf32>
    %133 = arith.mulf %128, %132 : vector<2x32xf32>
    %134 = arith.mulf %127, %131 : vector<2x32xf32>
    %135 = arith.addf %133, %134 : vector<2x32xf32>
    %136 = math.tanh %135 : vector<2x32xf32>
    %137 = arith.mulf %129, %136 : vector<2x32xf32>
    %c0_63 = arith.constant 0 : index
    %c0_64 = arith.constant 0 : index
    %138 = vector.load %arg6[%c0_63, %c0_64] : memref<2x32xf32, #tpu.memory_space<vmem>>, vector<2x32xf32>
    tpu.vector_store %arg6[%c0_63, %c0_64], %135 {strides = array<i32>} : memref<2x32xf32, #tpu.memory_space<vmem>>, vector<2x32xf32>,
    %c0_65 = arith.constant 0 : index
    %c0_66 = arith.constant 0 : index
    %139 = vector.load %arg5[%c0_65, %c0_66] : memref<2x32xf32, #tpu.memory_space<vmem>>, vector<2x32xf32>
    tpu.vector_store %arg5[%c0_65, %c0_66], %137 {strides = array<i32>} : memref<2x32xf32, #tpu.memory_space<vmem>>, vector<2x32xf32>,
    %140 = arith.truncf %137 : vector<2x32xf32> to vector<2x32xbf16>
    %c0_67 = arith.constant 0 : index
    %141 = arith.index_cast %113 : i32 to index
    %c0_68 = arith.constant 0 : index
    %c0_69 = arith.constant 0 : index
    %142 = vector.load %arg4[%c0_67, %141, %c0_68, %c0_69] : memref<1x8x2x32xbf16, #tpu.memory_space<vmem>>, vector<1x1x2x32xbf16>
    %143 = vector.shape_cast %142 : vector<1x1x2x32xbf16> to vector<2x32xbf16>
    %144 = vector.shape_cast %140 : vector<2x32xbf16> to vector<1x1x2x32xbf16>
    tpu.vector_store %arg4[%c0_67, %141, %c0_68, %c0_69], %144 {strides = array<i32>} : memref<1x8x2x32xbf16, #tpu.memory_space<vmem>>, vector<1x1x2x32xbf16>,
    %c4_i32 = arith.constant 4 : i32
    %c2_i32_70 = arith.constant 2 : i32
    %145 = arith.muli %c2_i32_70, %c4_i32 : i32
    %c7_i32_71 = arith.constant 7 : i32
    %146 = arith.subi %c7_i32_71, %145 : i32
    %147 = arith.muli %arg0, %146 : i32
    %148 = arith.addi %c4_i32, %147 : i32
    %149 = arith.index_cast %148 : i32 to index
    %c0_72 = arith.constant 0 : index
    %c0_73 = arith.constant 0 : index
    %150 = vector.load %arg2[%149, %c0_72, %c0_73] : memref<8x2x128xbf16, #tpu.memory_space<vmem>>, vector<1x2x128xbf16>
    %151 = vector.shape_cast %150 : vector<1x2x128xbf16> to vector<2x128xbf16>
    %152 = arith.extf %151 : vector<2x128xbf16> to vector<2x128xf32>
    %c0_74 = arith.constant 0 : index
    %c0_75 = arith.constant 0 : index
    %153 = vector.load %arg5[%c0_74, %c0_75] : memref<2x32xf32, #tpu.memory_space<vmem>>, vector<2x32xf32>
    %154 = arith.truncf %153 : vector<2x32xf32> to vector<2x32xbf16>
    %cst_76 = arith.constant dense<0.000000e+00> : vector<2x128xf32>
    %155 = tpu.matmul %154, %4, %cst_76 {dimension_numbers = #tpu.dot_dimension_numbers<[1], [0], [0], [1], [0, 0, 1, 1], [], []>} : vector<2x32xbf16>, vector<32x128xbf16>, vector<2x128xf32> -> vector<2x128xf32>
    %156 = arith.addf %152, %155 : vector<2x128xf32>
    %157 = arith.negf %156 : vector<2x128xf32>
    %158 = math.exp %157 : vector<2x128xf32>
    %cst_77 = arith.constant 1.000000e+00 : f32
    %159 = vector.broadcast %cst_77 : f32 to vector<2x128xf32>
    %160 = arith.addf %159, %158 : vector<2x128xf32>
    %161 = arith.divf %159, %160 : vector<2x128xf32>
    %162 = vector.extract_strided_slice %161 {offsets = [0, 0], sizes = [2, 32], strides = [1, 1]} : vector<2x128xf32> to vector<2x32xf32>
    %163 = vector.extract_strided_slice %161 {offsets = [0, 32], sizes = [2, 32], strides = [1, 1]} : vector<2x128xf32> to vector<2x32xf32>
    %164 = vector.extract_strided_slice %161 {offsets = [0, 96], sizes = [2, 32], strides = [1, 1]} : vector<2x128xf32> to vector<2x32xf32>
    %165 = vector.extract_strided_slice %156 {offsets = [0, 64], sizes = [2, 32], strides = [1, 1]} : vector<2x128xf32> to vector<2x32xf32>
    %166 = math.tanh %165 : vector<2x32xf32>
    %c0_78 = arith.constant 0 : index
    %c0_79 = arith.constant 0 : index
    %167 = vector.load %arg6[%c0_78, %c0_79] : memref<2x32xf32, #tpu.memory_space<vmem>>, vector<2x32xf32>
    %168 = arith.mulf %163, %167 : vector<2x32xf32>
    %169 = arith.mulf %162, %166 : vector<2x32xf32>
    %170 = arith.addf %168, %169 : vector<2x32xf32>
    %171 = math.tanh %170 : vector<2x32xf32>
    %172 = arith.mulf %164, %171 : vector<2x32xf32>
    %c0_80 = arith.constant 0 : index
    %c0_81 = arith.constant 0 : index
    %173 = vector.load %arg6[%c0_80, %c0_81] : memref<2x32xf32, #tpu.memory_space<vmem>>, vector<2x32xf32>
    tpu.vector_store %arg6[%c0_80, %c0_81], %170 {strides = array<i32>} : memref<2x32xf32, #tpu.memory_space<vmem>>, vector<2x32xf32>,
    %c0_82 = arith.constant 0 : index
    %c0_83 = arith.constant 0 : index
    %174 = vector.load %arg5[%c0_82, %c0_83] : memref<2x32xf32, #tpu.memory_space<vmem>>, vector<2x32xf32>
    tpu.vector_store %arg5[%c0_82, %c0_83], %172 {strides = array<i32>} : memref<2x32xf32, #tpu.memory_space<vmem>>, vector<2x32xf32>,
    %175 = arith.truncf %172 : vector<2x32xf32> to vector<2x32xbf16>
    %c0_84 = arith.constant 0 : index
    %176 = arith.index_cast %148 : i32 to index
    %c0_85 = arith.constant 0 : index
    %c0_86 = arith.constant 0 : index
    %177 = vector.load %arg4[%c0_84, %176, %c0_85, %c0_86] : memref<1x8x2x32xbf16, #tpu.memory_space<vmem>>, vector<1x1x2x32xbf16>
    %178 = vector.shape_cast %177 : vector<1x1x2x32xbf16> to vector<2x32xbf16>
    %179 = vector.shape_cast %175 : vector<2x32xbf16> to vector<1x1x2x32xbf16>
    tpu.vector_store %arg4[%c0_84, %176, %c0_85, %c0_86], %179 {strides = array<i32>} : memref<1x8x2x32xbf16, #tpu.memory_space<vmem>>, vector<1x1x2x32xbf16>,
    %c5_i32 = arith.constant 5 : i32
    %c2_i32_87 = arith.constant 2 : i32
    %180 = arith.muli %c2_i32_87, %c5_i32 : i32
    %c7_i32_88 = arith.constant 7 : i32
    %181 = arith.subi %c7_i32_88, %180 : i32
    %182 = arith.muli %arg0, %181 : i32
    %183 = arith.addi %c5_i32, %182 : i32
    %184 = arith.index_cast %183 : i32 to index
    %c0_89 = arith.constant 0 : index
    %c0_90 = arith.constant 0 : index
    %185 = vector.load %arg2[%184, %c0_89, %c0_90] : memref<8x2x128xbf16, #tpu.memory_space<vmem>>, vector<1x2x128xbf16>
    %186 = vector.shape_cast %185 : vector<1x2x128xbf16> to vector<2x128xbf16>
    %187 = arith.extf %186 : vector<2x128xbf16> to vector<2x128xf32>
    %c0_91 = arith.constant 0 : index
    %c0_92 = arith.constant 0 : index
    %188 = vector.load %arg5[%c0_91, %c0_92] : memref<2x32xf32, #tpu.memory_space<vmem>>, vector<2x32xf32>
    %189 = arith.truncf %188 : vector<2x32xf32> to vector<2x32xbf16>
    %cst_93 = arith.constant dense<0.000000e+00> : vector<2x128xf32>
    %190 = tpu.matmul %189, %4, %cst_93 {dimension_numbers = #tpu.dot_dimension_numbers<[1], [0], [0], [1], [0, 0, 1, 1], [], []>} : vector<2x32xbf16>, vector<32x128xbf16>, vector<2x128xf32> -> vector<2x128xf32>
    %191 = arith.addf %187, %190 : vector<2x128xf32>
    %192 = arith.negf %191 : vector<2x128xf32>
    %193 = math.exp %192 : vector<2x128xf32>
    %cst_94 = arith.constant 1.000000e+00 : f32
    %194 = vector.broadcast %cst_94 : f32 to vector<2x128xf32>
    %195 = arith.addf %194, %193 : vector<2x128xf32>
    %196 = arith.divf %194, %195 : vector<2x128xf32>
    %197 = vector.extract_strided_slice %196 {offsets = [0, 0], sizes = [2, 32], strides = [1, 1]} : vector<2x128xf32> to vector<2x32xf32>
    %198 = vector.extract_strided_slice %196 {offsets = [0, 32], sizes = [2, 32], strides = [1, 1]} : vector<2x128xf32> to vector<2x32xf32>
    %199 = vector.extract_strided_slice %196 {offsets = [0, 96], sizes = [2, 32], strides = [1, 1]} : vector<2x128xf32> to vector<2x32xf32>
    %200 = vector.extract_strided_slice %191 {offsets = [0, 64], sizes = [2, 32], strides = [1, 1]} : vector<2x128xf32> to vector<2x32xf32>
    %201 = math.tanh %200 : vector<2x32xf32>
    %c0_95 = arith.constant 0 : index
    %c0_96 = arith.constant 0 : index
    %202 = vector.load %arg6[%c0_95, %c0_96] : memref<2x32xf32, #tpu.memory_space<vmem>>, vector<2x32xf32>
    %203 = arith.mulf %198, %202 : vector<2x32xf32>
    %204 = arith.mulf %197, %201 : vector<2x32xf32>
    %205 = arith.addf %203, %204 : vector<2x32xf32>
    %206 = math.tanh %205 : vector<2x32xf32>
    %207 = arith.mulf %199, %206 : vector<2x32xf32>
    %c0_97 = arith.constant 0 : index
    %c0_98 = arith.constant 0 : index
    %208 = vector.load %arg6[%c0_97, %c0_98] : memref<2x32xf32, #tpu.memory_space<vmem>>, vector<2x32xf32>
    tpu.vector_store %arg6[%c0_97, %c0_98], %205 {strides = array<i32>} : memref<2x32xf32, #tpu.memory_space<vmem>>, vector<2x32xf32>,
    %c0_99 = arith.constant 0 : index
    %c0_100 = arith.constant 0 : index
    %209 = vector.load %arg5[%c0_99, %c0_100] : memref<2x32xf32, #tpu.memory_space<vmem>>, vector<2x32xf32>
    tpu.vector_store %arg5[%c0_99, %c0_100], %207 {strides = array<i32>} : memref<2x32xf32, #tpu.memory_space<vmem>>, vector<2x32xf32>,
    %210 = arith.truncf %207 : vector<2x32xf32> to vector<2x32xbf16>
    %c0_101 = arith.constant 0 : index
    %211 = arith.index_cast %183 : i32 to index
    %c0_102 = arith.constant 0 : index
    %c0_103 = arith.constant 0 : index
    %212 = vector.load %arg4[%c0_101, %211, %c0_102, %c0_103] : memref<1x8x2x32xbf16, #tpu.memory_space<vmem>>, vector<1x1x2x32xbf16>
    %213 = vector.shape_cast %212 : vector<1x1x2x32xbf16> to vector<2x32xbf16>
    %214 = vector.shape_cast %210 : vector<2x32xbf16> to vector<1x1x2x32xbf16>
    tpu.vector_store %arg4[%c0_101, %211, %c0_102, %c0_103], %214 {strides = array<i32>} : memref<1x8x2x32xbf16, #tpu.memory_space<vmem>>, vector<1x1x2x32xbf16>,
    %c6_i32 = arith.constant 6 : i32
    %c2_i32_104 = arith.constant 2 : i32
    %215 = arith.muli %c2_i32_104, %c6_i32 : i32
    %c7_i32_105 = arith.constant 7 : i32
    %216 = arith.subi %c7_i32_105, %215 : i32
    %217 = arith.muli %arg0, %216 : i32
    %218 = arith.addi %c6_i32, %217 : i32
    %219 = arith.index_cast %218 : i32 to index
    %c0_106 = arith.constant 0 : index
    %c0_107 = arith.constant 0 : index
    %220 = vector.load %arg2[%219, %c0_106, %c0_107] : memref<8x2x128xbf16, #tpu.memory_space<vmem>>, vector<1x2x128xbf16>
    %221 = vector.shape_cast %220 : vector<1x2x128xbf16> to vector<2x128xbf16>
    %222 = arith.extf %221 : vector<2x128xbf16> to vector<2x128xf32>
    %c0_108 = arith.constant 0 : index
    %c0_109 = arith.constant 0 : index
    %223 = vector.load %arg5[%c0_108, %c0_109] : memref<2x32xf32, #tpu.memory_space<vmem>>, vector<2x32xf32>
    %224 = arith.truncf %223 : vector<2x32xf32> to vector<2x32xbf16>
    %cst_110 = arith.constant dense<0.000000e+00> : vector<2x128xf32>
    %225 = tpu.matmul %224, %4, %cst_110 {dimension_numbers = #tpu.dot_dimension_numbers<[1], [0], [0], [1], [0, 0, 1, 1], [], []>} : vector<2x32xbf16>, vector<32x128xbf16>, vector<2x128xf32> -> vector<2x128xf32>
    %226 = arith.addf %222, %225 : vector<2x128xf32>
    %227 = arith.negf %226 : vector<2x128xf32>
    %228 = math.exp %227 : vector<2x128xf32>
    %cst_111 = arith.constant 1.000000e+00 : f32
    %229 = vector.broadcast %cst_111 : f32 to vector<2x128xf32>
    %230 = arith.addf %229, %228 : vector<2x128xf32>
    %231 = arith.divf %229, %230 : vector<2x128xf32>
    %232 = vector.extract_strided_slice %231 {offsets = [0, 0], sizes = [2, 32], strides = [1, 1]} : vector<2x128xf32> to vector<2x32xf32>
    %233 = vector.extract_strided_slice %231 {offsets = [0, 32], sizes = [2, 32], strides = [1, 1]} : vector<2x128xf32> to vector<2x32xf32>
    %234 = vector.extract_strided_slice %231 {offsets = [0, 96], sizes = [2, 32], strides = [1, 1]} : vector<2x128xf32> to vector<2x32xf32>
    %235 = vector.extract_strided_slice %226 {offsets = [0, 64], sizes = [2, 32], strides = [1, 1]} : vector<2x128xf32> to vector<2x32xf32>
    %236 = math.tanh %235 : vector<2x32xf32>
    %c0_112 = arith.constant 0 : index
    %c0_113 = arith.constant 0 : index
    %237 = vector.load %arg6[%c0_112, %c0_113] : memref<2x32xf32, #tpu.memory_space<vmem>>, vector<2x32xf32>
    %238 = arith.mulf %233, %237 : vector<2x32xf32>
    %239 = arith.mulf %232, %236 : vector<2x32xf32>
    %240 = arith.addf %238, %239 : vector<2x32xf32>
    %241 = math.tanh %240 : vector<2x32xf32>
    %242 = arith.mulf %234, %241 : vector<2x32xf32>
    %c0_114 = arith.constant 0 : index
    %c0_115 = arith.constant 0 : index
    %243 = vector.load %arg6[%c0_114, %c0_115] : memref<2x32xf32, #tpu.memory_space<vmem>>, vector<2x32xf32>
    tpu.vector_store %arg6[%c0_114, %c0_115], %240 {strides = array<i32>} : memref<2x32xf32, #tpu.memory_space<vmem>>, vector<2x32xf32>,
    %c0_116 = arith.constant 0 : index
    %c0_117 = arith.constant 0 : index
    %244 = vector.load %arg5[%c0_116, %c0_117] : memref<2x32xf32, #tpu.memory_space<vmem>>, vector<2x32xf32>
    tpu.vector_store %arg5[%c0_116, %c0_117], %242 {strides = array<i32>} : memref<2x32xf32, #tpu.memory_space<vmem>>, vector<2x32xf32>,
    %245 = arith.truncf %242 : vector<2x32xf32> to vector<2x32xbf16>
    %c0_118 = arith.constant 0 : index
    %246 = arith.index_cast %218 : i32 to index
    %c0_119 = arith.constant 0 : index
    %c0_120 = arith.constant 0 : index
    %247 = vector.load %arg4[%c0_118, %246, %c0_119, %c0_120] : memref<1x8x2x32xbf16, #tpu.memory_space<vmem>>, vector<1x1x2x32xbf16>
    %248 = vector.shape_cast %247 : vector<1x1x2x32xbf16> to vector<2x32xbf16>
    %249 = vector.shape_cast %245 : vector<2x32xbf16> to vector<1x1x2x32xbf16>
    tpu.vector_store %arg4[%c0_118, %246, %c0_119, %c0_120], %249 {strides = array<i32>} : memref<1x8x2x32xbf16, #tpu.memory_space<vmem>>, vector<1x1x2x32xbf16>,
    %c7_i32_121 = arith.constant 7 : i32
    %c2_i32_122 = arith.constant 2 : i32
    %250 = arith.muli %c2_i32_122, %c7_i32_121 : i32
    %c7_i32_123 = arith.constant 7 : i32
    %251 = arith.subi %c7_i32_123, %250 : i32
    %252 = arith.muli %arg0, %251 : i32
    %253 = arith.addi %c7_i32_121, %252 : i32
    %254 = arith.index_cast %253 : i32 to index
    %c0_124 = arith.constant 0 : index
    %c0_125 = arith.constant 0 : index
    %255 = vector.load %arg2[%254, %c0_124, %c0_125] : memref<8x2x128xbf16, #tpu.memory_space<vmem>>, vector<1x2x128xbf16>
    %256 = vector.shape_cast %255 : vector<1x2x128xbf16> to vector<2x128xbf16>
    %257 = arith.extf %256 : vector<2x128xbf16> to vector<2x128xf32>
    %c0_126 = arith.constant 0 : index
    %c0_127 = arith.constant 0 : index
    %258 = vector.load %arg5[%c0_126, %c0_127] : memref<2x32xf32, #tpu.memory_space<vmem>>, vector<2x32xf32>
    %259 = arith.truncf %258 : vector<2x32xf32> to vector<2x32xbf16>
    %cst_128 = arith.constant dense<0.000000e+00> : vector<2x128xf32>
    %260 = tpu.matmul %259, %4, %cst_128 {dimension_numbers = #tpu.dot_dimension_numbers<[1], [0], [0], [1], [0, 0, 1, 1], [], []>} : vector<2x32xbf16>, vector<32x128xbf16>, vector<2x128xf32> -> vector<2x128xf32>
    %261 = arith.addf %257, %260 : vector<2x128xf32>
    %262 = arith.negf %261 : vector<2x128xf32>
    %263 = math.exp %262 : vector<2x128xf32>
    %cst_129 = arith.constant 1.000000e+00 : f32
    %264 = vector.broadcast %cst_129 : f32 to vector<2x128xf32>
    %265 = arith.addf %264, %263 : vector<2x128xf32>
    %266 = arith.divf %264, %265 : vector<2x128xf32>
    %267 = vector.extract_strided_slice %266 {offsets = [0, 0], sizes = [2, 32], strides = [1, 1]} : vector<2x128xf32> to vector<2x32xf32>
    %268 = vector.extract_strided_slice %266 {offsets = [0, 32], sizes = [2, 32], strides = [1, 1]} : vector<2x128xf32> to vector<2x32xf32>
    %269 = vector.extract_strided_slice %266 {offsets = [0, 96], sizes = [2, 32], strides = [1, 1]} : vector<2x128xf32> to vector<2x32xf32>
    %270 = vector.extract_strided_slice %261 {offsets = [0, 64], sizes = [2, 32], strides = [1, 1]} : vector<2x128xf32> to vector<2x32xf32>
    %271 = math.tanh %270 : vector<2x32xf32>
    %c0_130 = arith.constant 0 : index
    %c0_131 = arith.constant 0 : index
    %272 = vector.load %arg6[%c0_130, %c0_131] : memref<2x32xf32, #tpu.memory_space<vmem>>, vector<2x32xf32>
    %273 = arith.mulf %268, %272 : vector<2x32xf32>
    %274 = arith.mulf %267, %271 : vector<2x32xf32>
    %275 = arith.addf %273, %274 : vector<2x32xf32>
    %276 = math.tanh %275 : vector<2x32xf32>
    %277 = arith.mulf %269, %276 : vector<2x32xf32>
    %c0_132 = arith.constant 0 : index
    %c0_133 = arith.constant 0 : index
    %278 = vector.load %arg6[%c0_132, %c0_133] : memref<2x32xf32, #tpu.memory_space<vmem>>, vector<2x32xf32>
    tpu.vector_store %arg6[%c0_132, %c0_133], %275 {strides = array<i32>} : memref<2x32xf32, #tpu.memory_space<vmem>>, vector<2x32xf32>,
    %c0_134 = arith.constant 0 : index
    %c0_135 = arith.constant 0 : index
    %279 = vector.load %arg5[%c0_134, %c0_135] : memref<2x32xf32, #tpu.memory_space<vmem>>, vector<2x32xf32>
    tpu.vector_store %arg5[%c0_134, %c0_135], %277 {strides = array<i32>} : memref<2x32xf32, #tpu.memory_space<vmem>>, vector<2x32xf32>,
    %280 = arith.truncf %277 : vector<2x32xf32> to vector<2x32xbf16>
    %c0_136 = arith.constant 0 : index
    %281 = arith.index_cast %253 : i32 to index
    %c0_137 = arith.constant 0 : index
    %c0_138 = arith.constant 0 : index
    %282 = vector.load %arg4[%c0_136, %281, %c0_137, %c0_138] : memref<1x8x2x32xbf16, #tpu.memory_space<vmem>>, vector<1x1x2x32xbf16>
    %283 = vector.shape_cast %282 : vector<1x1x2x32xbf16> to vector<2x32xbf16>
    %284 = vector.shape_cast %280 : vector<2x32xbf16> to vector<1x1x2x32xbf16>
    tpu.vector_store %arg4[%c0_136, %281, %c0_137, %c0_138], %284 {strides = array<i32>} : memref<1x8x2x32xbf16, #tpu.memory_space<vmem>>, vector<1x1x2x32xbf16>,
    %c8_i32 = arith.constant 8 : i32
    return
  }
  func.func @transform_0(%arg0: i32, %arg1: i32) -> (i32, i32, i32) {
    %c2_i32 = arith.constant 2 : i32
    %0 = arith.muli %c2_i32, %arg1 : i32
    %c0_i32 = arith.constant 0 : i32
    %1 = arith.subi %c0_i32, %0 : i32
    %2 = arith.muli %arg0, %1 : i32
    %3 = arith.addi %arg1, %2 : i32
    %c0_i32_0 = arith.constant 0 : i32
    %c0_i32_1 = arith.constant 0 : i32
    return %3, %c0_i32_0, %arg0 : i32, i32, i32
  }
  func.func @transform_1(%arg0: i32, %arg1: i32) -> (i32, i32, i32) {
    %c0_i32 = arith.constant 0 : i32
    %c0_i32_0 = arith.constant 0 : i32
    %c0_i32_1 = arith.constant 0 : i32
    return %arg0, %c0_i32, %c0_i32_0 : i32, i32, i32
  }
  func.func @transform_2(%arg0: i32, %arg1: i32) -> (i32, i32, i32, i32) {
    %c2_i32 = arith.constant 2 : i32
    %0 = arith.muli %c2_i32, %arg1 : i32
    %c0_i32 = arith.constant 0 : i32
    %1 = arith.subi %c0_i32, %0 : i32
    %2 = arith.muli %arg0, %1 : i32
    %3 = arith.addi %arg1, %2 : i32
    %c0_i32_0 = arith.constant 0 : i32
    %c0_i32_1 = arith.constant 0 : i32
    %c0_i32_2 = arith.constant 0 : i32
    return %arg0, %3, %c0_i32_0, %c0_i32_1 : i32, i32, i32, i32
  }
}

</mosaic_0001>

<llo_original>
// kernel: net_forward.5
$region0: #{net_forward.5}
  #allocation0 [shape = 'u32[]', space=smem, size = 0x4, offset = 0x4, fixed_abs, tag = 'smem constant byte address 0x4 - core index']
  #allocation1 [shape = 'u32[144,128]{1,0:T(1,128)}', space=vmem, size = 0x12000, scoped, tag = 'internal scratch']
  %s0 = inlined_call_operand.vmem [shape: bf16[1,16,16], index: 0, kind: input, shape index: {}]
  %s1 = inlined_call_operand.vmem [shape: bf16[1,16,256], index: 1, kind: input, shape index: {}]
  %s2 = inlined_call_operand.vmem [shape: f32[1,256], index: 2, kind: input, shape index: {}]
  %s3 = inlined_call_operand.vmem [shape: bf16[16,256], index: 3, kind: output, shape index: {}]
  %s4 = sld [smem:[#allocation0]]
  $region22: #{net_forward.5} parent=0
    _
  %s6 = ssub.s32 1, %s4
  %s7 = scalar_select 0, %s6, %s4
  // Predicated region
  $region2: #{net_forward.5} parent=0 // pred_check
    _
  $region3: #{net_forward.5} parent=0 // pred_check_branch
    %9 = sbr.rel (0) target = $region5
  $region4: #{net_forward.5} parent=0 // pred_region
    _
  $region5: #{net_forward.5} parent=0 // pred_fallthru
    _
  // Predicated region
  $region6: #{net_forward.5} parent=0 // pred_check
    _
  $region7: #{net_forward.5} parent=0 // pred_check_branch
    %11 = sbr.rel (0) target = $region9
  $region8: #{net_forward.5} parent=0 // pred_region
    _
  $region9: #{net_forward.5} parent=0 // pred_fallthru
    _
  // Predicated region
  $region10: #{net_forward.5} parent=0 // pred_check
    _
  $region11: #{net_forward.5} parent=0 // pred_check_branch
    %13 = sbr.rel (0) target = $region13
  $region12: #{net_forward.5} parent=0 // pred_region
    _
  $region13: #{net_forward.5} parent=0 // pred_fallthru
    _
  %v15 = vld [vmem:[%s0] sm:$0xf]
  %v16 = vld [vmem:[%s0 + $0x4] sm:$0xf]
  %v17 = vld [vmem:[%s1] sm:$0xff]
  %v18 = vld [vmem:[%s1 + $0x8] sm:$0xff]
  %v19 = vld [vmem:[%s2] sm:$0x3]
  %v21 = vlaneseq
  %v22 = vshrl.u32 %v21, 7
  %v23 = vsub.s32 0, %v22
  %v24 = vrot.slane %v19, %v23
  %v25 = vlaneseq
  %v26 = vshrl.u32 %v25, 7
  %v27 = vsub.s32 1, %v26
  %v28 = vrot.slane %v19, %v27
  %v33 = vunpack.c.l.b16 %v15
  %v34 = vunpack.c.l.b16 %v16
  %v35 = vpack.c.b16 %v34, %v33
  %v38 = vunpack.c.l.b16 %v17
  %v39 = vunpack.c.h.b16 %v17
  %v40 = vunpack.c.l.b16 %v18
  %v41 = vunpack.c.h.b16 %v18
  %v42 = vpack.c.b16 %v40, %v38
  %v43 = vpack.c.b16 %v41, %v39
  %vm46 = vcmask 130048
  %v48 = vsel %vm46, %v35, 0
  %50 = vmatprep.subr.bf16.mxu0 %v43
  %51 = vmatpush1.bf16.msra.mxu0 %v42
  %52 = vmatprep.subr.bf16.mxu0 0
  %53 = vmatpush1.bf16.msra.mxu0 0
  %54 = vmatprep.subr.bf16.mxu0 0
  %55 = vmatpush1.bf16.msra.mxu0 0
  %56 = vmatprep.subr.bf16.mxu0 0
  %57 = vmatpush1.bf16.msra.mxu0 0
  %58 = vmatprep.subr.bf16.mxu0 0
  %59 = vmatpush1.bf16.msra.mxu0 0
  %60 = vmatprep.subr.bf16.mxu0 0
  %61 = vmatpush1.bf16.msra.mxu0 0
  %62 = vmatprep.subr.bf16.mxu0 0
  %63 = vmatpush1.bf16.msra.mxu0 0
  %64 = vmatprep.subr.bf16.mxu0 0
  %65 = vmatpush1.bf16.msra.mxu0 0
  %66 = vmatprep.subr.bf16.mxu0 0
  %67 = vmatpush1.bf16.msra.mxu0 0
  %68 = vmatprep.subr.bf16.mxu0 0
  %69 = vmatpush1.bf16.msra.mxu0 0
  %70 = vmatprep.subr.bf16.mxu0 0
  %71 = vmatpush1.bf16.msra.mxu0 0
  %72 = vmatprep.subr.bf16.mxu0 0
  %73 = vmatpush1.bf16.msra.mxu0 0
  %74 = vmatprep.subr.bf16.mxu0 0
  %75 = vmatpush1.bf16.msra.mxu0 0
  %76 = vmatprep.subr.bf16.mxu0 0
  %77 = vmatpush1.bf16.msra.mxu0 0
  %78 = vmatprep.subr.bf16.mxu0 0
  %79 = vmatpush1.bf16.msra.mxu0 0
  %80 = vmatprep.subr.bf16.mxu0 0
  %81 = vmatpush1.bf16.msra.mxu0 0
  %82 = vmatprep.mubr.bf16.mxu0 0
  %83 = vmatmul.mubr.bf16.gmra.mrb[0].mxu0 %v48
  %v84 = vpop.f32.mrb[0].mxu0
  %v85 = vadd.f32 %v24, %v84
  %v86 = vpop.f32.mrb[0].mxu0
  %v87 = vadd.f32 %v28, %v86
  %v88 = vpop.f32.mrb[0].mxu0
  %v89 = vadd.f32 %v24, %v88
  %v90 = vpop.f32.mrb[0].mxu0
  %v91 = vadd.f32 %v28, %v90
  %92 = vdwg.mxu0
  %v93 = vpack.c.bf16 %v89, %v85
  %v94 = vpack.c.bf16 %v91, %v87
  %v97 = vunpack.c.l.b16 %v93
  %v98 = vunpack.c.l.b16 %v94
  %v99 = vunpack.c.h.b16 %v93
  %v100 = vunpack.c.h.b16 %v94
  %v101 = vpack.c.b16 %v98, %v97
  %v102 = vpack.c.b16 %v100, %v99
  %105 = vst [vmem:[%s3] sm:$0xff] %v101
  %106 = vst [vmem:[%s3 + $0x8] sm:$0xff] %v102
  // Predicated region
  $region14: #{net_forward.5} parent=0 // pred_check
    _
  $region15: #{net_forward.5} parent=0 // pred_check_branch
    %108 = sbr.rel (0) target = $region17
  $region16: #{net_forward.5} parent=0 // pred_region
    _
  $region17: #{net_forward.5} parent=0 // pred_fallthru
    _
  // Predicated region
  $region18: #{net_forward.5} parent=0 // pred_check
    _
  $region19: #{net_forward.5} parent=0 // pred_check_branch
    %110 = sbr.rel (0) target = $region21
  $region20: #{net_forward.5} parent=0 // pred_region
    _
  $region21: #{net_forward.5} parent=0 // pred_fallthru
    _

// kernel: net_forward.9
$region0: #{net_forward.9}
  #allocation0 [shape = 'u32[]', space=smem, size = 0x4, offset = 0x4, fixed_abs, tag = 'smem constant byte address 0x4 - core index']
  #allocation1 [shape = 'u32[144,128]{1,0:T(1,128)}', space=vmem, size = 0x12000, scoped, tag = 'internal scratch']
  %s0 = inlined_call_operand.vmem [shape: bf16[2,16,32], index: 0, kind: input, shape index: {}]
  %s1 = inlined_call_operand.vmem [shape: bf16[2,32,128], index: 1, kind: input, shape index: {}]
  %s2 = inlined_call_operand.vmem [shape: f32[1,128], index: 2, kind: input, shape index: {}]
  %s3 = inlined_call_operand.vmem [shape: f32[16,128], index: 3, kind: output, shape index: {}]
  %s4 = sld [smem:[#allocation0]]
  $region22: #{net_forward.9} parent=0
    _
  %s6 = ssub.s32 1, %s4
  %s7 = scalar_select 0, %s6, %s4
  // Predicated region
  $region2: #{net_forward.9} parent=0 // pred_check
    _
  $region3: #{net_forward.9} parent=0 // pred_check_branch
    %9 = sbr.rel (0) target = $region5
  $region4: #{net_forward.9} parent=0 // pred_region
    _
  $region5: #{net_forward.9} parent=0 // pred_fallthru
    _
  // Predicated region
  $region6: #{net_forward.9} parent=0 // pred_check
    _
  $region7: #{net_forward.9} parent=0 // pred_check_branch
    %11 = sbr.rel (0) target = $region9
  $region8: #{net_forward.9} parent=0 // pred_region
    _
  $region9: #{net_forward.9} parent=0 // pred_fallthru
    _
  // Predicated region
  $region10: #{net_forward.9} parent=0 // pred_check
    _
  $region11: #{net_forward.9} parent=0 // pred_check_branch
    %13 = sbr.rel (0) target = $region13
  $region12: #{net_forward.9} parent=0 // pred_region
    _
  $region13: #{net_forward.9} parent=0 // pred_fallthru
    _
  %v15 = vld [vmem:[%s0] sm:$0xf]
  %v16 = vld [vmem:[%s0 + $0x4] sm:$0xf]
  %v17 = vld [vmem:[%s1] sm:$0xf]
  %v18 = vld [vmem:[%s1 + $0x4] sm:$0xf]
  %v19 = vld [vmem:[%s1 + $0x8] sm:$0xf]
  %v20 = vld [vmem:[%s1 + $0xc] sm:$0xf]
  %s21 = scalar_lea.vmem %s0, 8
  %v22 = vld [vmem:[%s21] sm:$0xf]
  %v23 = vld [vmem:[%s21 + $0x4] sm:$0xf]
  %s24 = scalar_lea.vmem %s1, 16
  %v25 = vld [vmem:[%s24] sm:$0xf]
  %v26 = vld [vmem:[%s24 + $0x4] sm:$0xf]
  %v27 = vld [vmem:[%s24 + $0x8] sm:$0xf]
  %v28 = vld [vmem:[%s24 + $0xc] sm:$0xf]
  %v31 = vunpack.c.l.b16 %v22
  %v32 = vunpack.c.l.b16 %v23
  %v33 = vpack.c.b16 %v32, %v31
  %v38 = vunpack.c.l.b16 %v25
  %v39 = vunpack.c.l.b16 %v26
  %v40 = vunpack.c.l.b16 %v27
  %v41 = vunpack.c.l.b16 %v28
  %v42 = vpack.c.b16 %v39, %v38
  %v43 = vpack.c.b16 %v41, %v40
  %vm46 = vcmask 261120
  %v48 = vsel %vm46, %v33, 0
  %50 = vmatprep.subr.bf16.mxu0 0
  %51 = vmatpush1.bf16.msra.mxu0 %v42
  %52 = vmatprep.subr.bf16.mxu0 0
  %53 = vmatpush1.bf16.msra.mxu0 %v43
  %54 = vmatprep.subr.bf16.mxu0 0
  %55 = vmatpush1.bf16.msra.mxu0 0
  %56 = vmatprep.subr.bf16.mxu0 0
  %57 = vmatpush1.bf16.msra.mxu0 0
  %58 = vmatprep.subr.bf16.mxu0 0
  %59 = vmatpush1.bf16.msra.mxu0 0
  %60 = vmatprep.subr.bf16.mxu0 0
  %61 = vmatpush1.bf16.msra.mxu0 0
  %62 = vmatprep.subr.bf16.mxu0 0
  %63 = vmatpush1.bf16.msra.mxu0 0
  %64 = vmatprep.subr.bf16.mxu0 0
  %65 = vmatpush1.bf16.msra.mxu0 0
  %66 = vmatprep.subr.bf16.mxu0 0
  %67 = vmatpush1.bf16.msra.mxu0 0
  %68 = vmatprep.subr.bf16.mxu0 0
  %69 = vmatpush1.bf16.msra.mxu0 0
  %70 = vmatprep.subr.bf16.mxu0 0
  %71 = vmatpush1.bf16.msra.mxu0 0
  %72 = vmatprep.subr.bf16.mxu0 0
  %73 = vmatpush1.bf16.msra.mxu0 0
  %74 = vmatprep.subr.bf16.mxu0 0
  %75 = vmatpush1.bf16.msra.mxu0 0
  %76 = vmatprep.subr.bf16.mxu0 0
  %77 = vmatpush1.bf16.msra.mxu0 0
  %78 = vmatprep.subr.bf16.mxu0 0
  %79 = vmatpush1.bf16.msra.mxu0 0
  %80 = vmatprep.subr.bf16.mxu0 0
  %81 = vmatpush1.bf16.msra.mxu0 0
  %82 = vmatprep.mubr.bf16.mxu0 0
  %83 = vmatmul.mubr.bf16.gmra.mrb[0].mxu0 %v48
  %v84 = vpop.f32.mrb[0].mxu0
  %v85 = vadd.f32 0.0, %v84
  %v86 = vpop.f32.mrb[0].mxu0
  %v87 = vpop.f32.mrb[0].mxu0
  %v88 = vadd.f32 0.0, %v87
  %v89 = vpop.f32.mrb[0].mxu0
  %90 = vdwg.mxu0
  %v93 = vunpack.c.l.b16 %v15
  %v94 = vunpack.c.l.b16 %v16
  %v95 = vpack.c.b16 %v94, %v93
  %v100 = vunpack.c.l.b16 %v17
  %v101 = vunpack.c.l.b16 %v18
  %v102 = vunpack.c.l.b16 %v19
  %v103 = vunpack.c.l.b16 %v20
  %v104 = vpack.c.b16 %v101, %v100
  %v105 = vpack.c.b16 %v103, %v102
  %v109 = vsel %vm46, %v95, 0
  %111 = vmatprep.subr.bf16.mxu0 0
  %112 = vmatpush1.bf16.msra.mxu0 %v104
  %113 = vmatprep.subr.bf16.mxu0 0
  %114 = vmatpush1.bf16.msra.mxu0 %v105
  %115 = vmatprep.subr.bf16.mxu0 0
  %116 = vmatpush1.bf16.msra.mxu0 0
  %117 = vmatprep.subr.bf16.mxu0 0
  %118 = vmatpush1.bf16.msra.mxu0 0
  %119 = vmatprep.subr.bf16.mxu0 0
  %120 = vmatpush1.bf16.msra.mxu0 0
  %121 = vmatprep.subr.bf16.mxu0 0
  %122 = vmatpush1.bf16.msra.mxu0 0
  %123 = vmatprep.subr.bf16.mxu0 0
  %124 = vmatpush1.bf16.msra.mxu0 0
  %125 = vmatprep.subr.bf16.mxu0 0
  %126 = vmatpush1.bf16.msra.mxu0 0
  %127 = vmatprep.subr.bf16.mxu0 0
  %128 = vmatpush1.bf16.msra.mxu0 0
  %129 = vmatprep.subr.bf16.mxu0 0
  %130 = vmatpush1.bf16.msra.mxu0 0
  %131 = vmatprep.subr.bf16.mxu0 0
  %132 = vmatpush1.bf16.msra.mxu0 0
  %133 = vmatprep.subr.bf16.mxu0 0
  %134 = vmatpush1.bf16.msra.mxu0 0
  %135 = vmatprep.subr.bf16.mxu0 0
  %136 = vmatpush1.bf16.msra.mxu0 0
  %137 = vmatprep.subr.bf16.mxu0 0
  %138 = vmatpush1.bf16.msra.mxu0 0
  %139 = vmatprep.subr.bf16.mxu0 0
  %140 = vmatpush1.bf16.msra.mxu0 0
  %141 = vmatprep.subr.bf16.mxu0 0
  %142 = vmatpush1.bf16.msra.mxu0 0
  %143 = vmatprep.mubr.bf16.mxu0 0
  %144 = vmatmul.mubr.bf16.gmra.mrb[0].mxu0 %v109
  %v145 = vpop.f32.mrb[0].mxu0
  %v146 = vadd.f32 %v85, %v145
  %v147 = vpop.f32.mrb[0].mxu0
  %v148 = vpop.f32.mrb[0].mxu0
  %v149 = vadd.f32 %v88, %v148
  %v150 = vpop.f32.mrb[0].mxu0
  %151 = vdwg.mxu0
  %v152 = vld [vmem:[%s2] sm:$0x1]
  %v154 = vlaneseq
  %v155 = vshrl.u32 %v154, 7
  %v156 = vsub.s32 0, %v155
  %v157 = vrot.slane %v152, %v156
  %v159 = vadd.f32 %v146, %v157
  %v160 = vadd.f32 %v149, %v157
  %161 = vst [vmem:[%s3] sm:$0xff] %v159
  %162 = vst [vmem:[%s3 + $0x8] sm:$0xff] %v160
  // Predicated region
  $region14: #{net_forward.9} parent=0 // pred_check
    _
  $region15: #{net_forward.9} parent=0 // pred_check_branch
    %164 = sbr.rel (0) target = $region17
  $region16: #{net_forward.9} parent=0 // pred_region
    _
  $region17: #{net_forward.9} parent=0 // pred_fallthru
    _
  // Predicated region
  $region18: #{net_forward.9} parent=0 // pred_check
    _
  $region19: #{net_forward.9} parent=0 // pred_check_branch
    %166 = sbr.rel (0) target = $region21
  $region20: #{net_forward.9} parent=0 // pred_region
    _
  $region21: #{net_forward.9} parent=0 // pred_fallthru
    _

// kernel: net_forward.7
$region0: #{net_forward.7}
  #allocation0 [shape = 'u32[]', space=smem, size = 0x4, offset = 0x4, fixed_abs, tag = 'smem constant byte address 0x4 - core index']
  #allocation1 [shape = 'u32[144,128]{1,0:T(1,128)}', space=vmem, size = 0x12000, scoped, tag = 'internal scratch']
  %s0 = inlined_call_operand.vmem [shape: bf16[2,16,32], index: 0, kind: input, shape index: {}]
  %s1 = inlined_call_operand.vmem [shape: bf16[2,32,256], index: 1, kind: input, shape index: {}]
  %s2 = inlined_call_operand.vmem [shape: f32[1,256], index: 2, kind: input, shape index: {}]
  %s3 = inlined_call_operand.vmem [shape: bf16[16,256], index: 3, kind: output, shape index: {}]
  %s4 = sld [smem:[#allocation0]]
  $region22: #{net_forward.7} parent=0
    _
  %s6 = ssub.s32 1, %s4
  %s7 = scalar_select 0, %s6, %s4
  // Predicated region
  $region2: #{net_forward.7} parent=0 // pred_check
    _
  $region3: #{net_forward.7} parent=0 // pred_check_branch
    %9 = sbr.rel (0) target = $region5
  $region4: #{net_forward.7} parent=0 // pred_region
    _
  $region5: #{net_forward.7} parent=0 // pred_fallthru
    _
  // Predicated region
  $region6: #{net_forward.7} parent=0 // pred_check
    _
  $region7: #{net_forward.7} parent=0 // pred_check_branch
    %11 = sbr.rel (0) target = $region9
  $region8: #{net_forward.7} parent=0 // pred_region
    _
  $region9: #{net_forward.7} parent=0 // pred_fallthru
    _
  // Predicated region
  $region10: #{net_forward.7} parent=0 // pred_check
    _
  $region11: #{net_forward.7} parent=0 // pred_check_branch
    %13 = sbr.rel (0) target = $region13
  $region12: #{net_forward.7} parent=0 // pred_region
    _
  $region13: #{net_forward.7} parent=0 // pred_fallthru
    _
  %v15 = vld [vmem:[%s0] sm:$0xf]
  %v16 = vld [vmem:[%s0 + $0x4] sm:$0xf]
  %v17 = vld [vmem:[%s1] sm:$0xff]
  %v18 = vld [vmem:[%s1 + $0x8] sm:$0xff]
  %v19 = vld [vmem:[%s1 + $0x10] sm:$0xff]
  %v20 = vld [vmem:[%s1 + $0x18] sm:$0xff]
  %s21 = scalar_lea.vmem %s0, 8
  %v22 = vld [vmem:[%s21] sm:$0xf]
  %v23 = vld [vmem:[%s21 + $0x4] sm:$0xf]
  %s24 = scalar_lea.vmem %s1, 32
  %v25 = vld [vmem:[%s24] sm:$0xff]
  %v26 = vld [vmem:[%s24 + $0x8] sm:$0xff]
  %v27 = vld [vmem:[%s24 + $0x10] sm:$0xff]
  %v28 = vld [vmem:[%s24 + $0x18] sm:$0xff]
  %v31 = vunpack.c.l.b16 %v22
  %v32 = vunpack.c.l.b16 %v23
  %v33 = vpack.c.b16 %v32, %v31
  %v38 = vunpack.c.l.b16 %v25
  %v39 = vunpack.c.h.b16 %v25
  %v40 = vunpack.c.l.b16 %v26
  %v41 = vunpack.c.h.b16 %v26
  %v42 = vunpack.c.l.b16 %v27
  %v43 = vunpack.c.h.b16 %v27
  %v44 = vunpack.c.l.b16 %v28
  %v45 = vunpack.c.h.b16 %v28
  %v46 = vpack.c.b16 %v40, %v38
  %v47 = vpack.c.b16 %v41, %v39
  %v48 = vpack.c.b16 %v44, %v42
  %v49 = vpack.c.b16 %v45, %v43
  %vm54 = vcmask 261120
  %v56 = vsel %vm54, %v33, 0
  %58 = vmatprep.subr.bf16.mxu0 %v47
  %59 = vmatpush1.bf16.msra.mxu0 %v46
  %60 = vmatprep.subr.bf16.mxu0 %v49
  %61 = vmatpush1.bf16.msra.mxu0 %v48
  %62 = vmatprep.subr.bf16.mxu0 0
  %63 = vmatpush1.bf16.msra.mxu0 0
  %64 = vmatprep.subr.bf16.mxu0 0
  %65 = vmatpush1.bf16.msra.mxu0 0
  %66 = vmatprep.subr.bf16.mxu0 0
  %67 = vmatpush1.bf16.msra.mxu0 0
  %68 = vmatprep.subr.bf16.mxu0 0
  %69 = vmatpush1.bf16.msra.mxu0 0
  %70 = vmatprep.subr.bf16.mxu0 0
  %71 = vmatpush1.bf16.msra.mxu0 0
  %72 = vmatprep.subr.bf16.mxu0 0
  %73 = vmatpush1.bf16.msra.mxu0 0
  %74 = vmatprep.subr.bf16.mxu0 0
  %75 = vmatpush1.bf16.msra.mxu0 0
  %76 = vmatprep.subr.bf16.mxu0 0
  %77 = vmatpush1.bf16.msra.mxu0 0
  %78 = vmatprep.subr.bf16.mxu0 0
  %79 = vmatpush1.bf16.msra.mxu0 0
  %80 = vmatprep.subr.bf16.mxu0 0
  %81 = vmatpush1.bf16.msra.mxu0 0
  %82 = vmatprep.subr.bf16.mxu0 0
  %83 = vmatpush1.bf16.msra.mxu0 0
  %84 = vmatprep.subr.bf16.mxu0 0
  %85 = vmatpush1.bf16.msra.mxu0 0
  %86 = vmatprep.subr.bf16.mxu0 0
  %87 = vmatpush1.bf16.msra.mxu0 0
  %88 = vmatprep.subr.bf16.mxu0 0
  %89 = vmatpush1.bf16.msra.mxu0 0
  %90 = vmatprep.mubr.bf16.mxu0 0
  %91 = vmatmul.mubr.bf16.gmra.mrb[0].mxu0 %v56
  %v92 = vpop.f32.mrb[0].mxu0
  %v93 = vadd.f32 0.0, %v92
  %v94 = vpop.f32.mrb[0].mxu0
  %v95 = vadd.f32 0.0, %v94
  %v96 = vpop.f32.mrb[0].mxu0
  %v97 = vadd.f32 0.0, %v96
  %v98 = vpop.f32.mrb[0].mxu0
  %v99 = vadd.f32 0.0, %v98
  %100 = vdwg.mxu0
  %v103 = vunpack.c.l.b16 %v15
  %v104 = vunpack.c.l.b16 %v16
  %v105 = vpack.c.b16 %v104, %v103
  %v110 = vunpack.c.l.b16 %v17
  %v111 = vunpack.c.h.b16 %v17
  %v112 = vunpack.c.l.b16 %v18
  %v113 = vunpack.c.h.b16 %v18
  %v114 = vunpack.c.l.b16 %v19
  %v115 = vunpack.c.h.b16 %v19
  %v116 = vunpack.c.l.b16 %v20
  %v117 = vunpack.c.h.b16 %v20
  %v118 = vpack.c.b16 %v112, %v110
  %v119 = vpack.c.b16 %v113, %v111
  %v120 = vpack.c.b16 %v116, %v114
  %v121 = vpack.c.b16 %v117, %v115
  %v127 = vsel %vm54, %v105, 0
  %129 = vmatprep.subr.bf16.mxu0 %v119
  %130 = vmatpush1.bf16.msra.mxu0 %v118
  %131 = vmatprep.subr.bf16.mxu0 %v121
  %132 = vmatpush1.bf16.msra.mxu0 %v120
  %133 = vmatprep.subr.bf16.mxu0 0
  %134 = vmatpush1.bf16.msra.mxu0 0
  %135 = vmatprep.subr.bf16.mxu0 0
  %136 = vmatpush1.bf16.msra.mxu0 0
  %137 = vmatprep.subr.bf16.mxu0 0
  %138 = vmatpush1.bf16.msra.mxu0 0
  %139 = vmatprep.subr.bf16.mxu0 0
  %140 = vmatpush1.bf16.msra.mxu0 0
  %141 = vmatprep.subr.bf16.mxu0 0
  %142 = vmatpush1.bf16.msra.mxu0 0
  %143 = vmatprep.subr.bf16.mxu0 0
  %144 = vmatpush1.bf16.msra.mxu0 0
  %145 = vmatprep.subr.bf16.mxu0 0
  %146 = vmatpush1.bf16.msra.mxu0 0
  %147 = vmatprep.subr.bf16.mxu0 0
  %148 = vmatpush1.bf16.msra.mxu0 0
  %149 = vmatprep.subr.bf16.mxu0 0
  %150 = vmatpush1.bf16.msra.mxu0 0
  %151 = vmatprep.subr.bf16.mxu0 0
  %152 = vmatpush1.bf16.msra.mxu0 0
  %153 = vmatprep.subr.bf16.mxu0 0
  %154 = vmatpush1.bf16.msra.mxu0 0
  %155 = vmatprep.subr.bf16.mxu0 0
  %156 = vmatpush1.bf16.msra.mxu0 0
  %157 = vmatprep.subr.bf16.mxu0 0
  %158 = vmatpush1.bf16.msra.mxu0 0
  %159 = vmatprep.subr.bf16.mxu0 0
  %160 = vmatpush1.bf16.msra.mxu0 0
  %161 = vmatprep.mubr.bf16.mxu0 0
  %162 = vmatmul.mubr.bf16.gmra.mrb[0].mxu0 %v127
  %v163 = vpop.f32.mrb[0].mxu0
  %v164 = vadd.f32 %v93, %v163
  %v165 = vpop.f32.mrb[0].mxu0
  %v166 = vadd.f32 %v95, %v165
  %v167 = vpop.f32.mrb[0].mxu0
  %v168 = vadd.f32 %v97, %v167
  %v169 = vpop.f32.mrb[0].mxu0
  %v170 = vadd.f32 %v99, %v169
  %171 = vdwg.mxu0
  %v172 = vld [vmem:[%s2] sm:$0x3]
  %v174 = vlaneseq
  %v175 = vshrl.u32 %v174, 7
  %v176 = vsub.s32 0, %v175
  %v177 = vrot.slane %v172, %v176
  %v178 = vlaneseq
  %v179 = vshrl.u32 %v178, 7
  %v180 = vsub.s32 1, %v179
  %v181 = vrot.slane %v172, %v180
  %v184 = vadd.f32 %v164, %v177
  %v185 = vadd.f32 %v166, %v181
  %v186 = vadd.f32 %v168, %v177
  %v187 = vadd.f32 %v170, %v181
  %v188 = vpack.c.bf16 %v186, %v184
  %v189 = vpack.c.bf16 %v187, %v185
  %v192 = vunpack.c.l.b16 %v188
  %v193 = vunpack.c.l.b16 %v189
  %v194 = vunpack.c.h.b16 %v188
  %v195 = vunpack.c.h.b16 %v189
  %v196 = vpack.c.b16 %v193, %v192
  %v197 = vpack.c.b16 %v195, %v194
  %200 = vst [vmem:[%s3] sm:$0xff] %v196
  %201 = vst [vmem:[%s3 + $0x8] sm:$0xff] %v197
  // Predicated region
  $region14: #{net_forward.7} parent=0 // pred_check
    _
  $region15: #{net_forward.7} parent=0 // pred_check_branch
    %203 = sbr.rel (0) target = $region17
  $region16: #{net_forward.7} parent=0 // pred_region
    _
  $region17: #{net_forward.7} parent=0 // pred_fallthru
    _
  // Predicated region
  $region18: #{net_forward.7} parent=0 // pred_check
    _
  $region19: #{net_forward.7} parent=0 // pred_check_branch
    %205 = sbr.rel (0) target = $region21
  $region20: #{net_forward.7} parent=0 // pred_region
    _
  $region21: #{net_forward.7} parent=0 // pred_fallthru
    _

// kernel: net_forward.6
$region0: #{net_forward.6}
  #allocation0 [shape = 'u32[]', space=smem, size = 0x4, offset = 0x4, fixed_abs, tag = 'smem constant byte address 0x4 - core index']
  #allocation1 [shape = 'u32[144,128]{1,0:T(1,128)}', space=vmem, size = 0x12000, scoped, tag = 'internal scratch']
  #allocation2 [shape = 'f32[2,32]{1,0:T(2,128)}', space=vmem, size = 0x400, scoped, tag = 'scratch operand']
  #allocation3 [shape = 'f32[2,32]{1,0:T(2,128)}', space=vmem, size = 0x400, scoped, tag = 'scratch operand']
  %s0 = inlined_call_operand.vmem [shape: bf16[8,2,256], index: 0, kind: input, shape index: {}]
  %s1 = inlined_call_operand.vmem [shape: bf16[2,32,128], index: 1, kind: input, shape index: {}]
  %s2 = inlined_call_operand.vmem [shape: bf16[2,8,2,32], index: 2, kind: output, shape index: {}]
  %s3 = sld [smem:[#allocation0]]
  $region86: #{net_forward.6} parent=0
    _
  %s5 = ssub.s32 1, %s3
  %s6 = scalar_select 0, %s5, %s3
  $region1: #{net_forward.6} parent=0
    #allocation4 [shape = 'u8[8192]{0}', space=vmem, size = 0x2000, scoped, tag = 'input window, operand 0']
    loop: start=0, step=1, limit=4
    $region2: #{net_forward.6} parent=1 // loop_pre_header
      _
    $region3: #{net_forward.6} parent=1 // loop_header
      %s8 = sphi 0, %s12
      %p9 = scmp.ge.s32.totalorder %s8, 4
      %s15 = sphi 0, %s27
      %s16 = sphi 0, %s23
      %s17 = sphi 0, %s15
      %s18 = sphi 0, %s16
      %s19 = sphi 0, %s17
      %s20 = sphi 0, %s18
      %s40 = sphi 0, %s42
      %s43 = sphi 0, %s40
      %s44 = sphi 0, %s43
      %s60 = sphi 0, %s44
      %s66 = sphi 0, %s68
      %s69 = sphi 0, %s66
      %s70 = sphi 0, %s69
      %s86 = sphi 0, %s70
      %s102 = sphi 0, %s104
      %s105 = sphi 0, %s102
      %s106 = sphi 0, %s105
      %s122 = sphi 0, %s106
    $region4: #{net_forward.6} parent=1 // loop_header_branch
      %11 = sbr.rel (%p9) target = $region8
    $region5: #{net_forward.6} parent=1 // loop_body
      %s13 = ssub.s32 %s8, 1
      %s14 = ssub.s32 %s8, 2
      %s21 = sadd.s32 1, %s16
      %p22 = scmp.ge.s32.totalorder %s21, 1
      %s23 = scalar_select %p22, 0, %s21
      %s24 = sadd.s32 1, %s15
      %s25 = scalar_select %p22, %s24, %s15
      %p26 = scmp.ge.s32.totalorder %s25, 2
      %s27 = scalar_select %p26, 0, %s25
      %s28 = smul.u32 %s16, 2
      %s29 = ssub.s32 0, %s28
      %s30 = smul.u32 %s15, %s29
      %s31 = sadd.s32 %s16, %s30
      %s32 = smul.u32 %s23, 2
      %s33 = ssub.s32 0, %s32
      %s34 = smul.u32 %s27, %s33
      %s35 = sadd.s32 %s23, %s34
      %s36 = ssub.s32 %s31, %s35
      %s37 = ssub.s32 %s15, %s27
      %s38 = sor.u32 %s36, %s37
      %p39 = scmp.eq.s32.totalorder %s38, 0
      %s41 = sadd.s32 %s40, 1
      %s42 = scalar_select %p39, %s40, %s41
      %p45 = pneg %p39
      %p46 = scmp.eq.s32.totalorder %s8, 1
      %p47 = por %p45, %p46
      %p48 = scmp.ne.s32.totalorder %s40, %s43
      %p49 = scmp.eq.s32.totalorder %s8, 0
      %p50 = por %p48, %p49
      %p51 = scmp.ne.s32.totalorder %s40, %s43
      %p52 = scmp.eq.s32.totalorder %s13, 1
      %p53 = por %p51, %p52
      %p54 = scmp.ne.s32.totalorder %s43, %s44
      %p55 = scmp.eq.s32.totalorder %s13, 0
      %p56 = por %p54, %p55
      %p57 = scmp.ne.s32.totalorder %s43, %s44
      %p58 = scmp.eq.s32.totalorder %s14, 1
      %p59 = por %p57, %p58
      %p61 = scmp.ne.s32.totalorder %s44, %s60
      %p62 = scmp.eq.s32.totalorder %s14, 0
      %p63 = por %p61, %p62
      %s64 = ssub.s32 %s15, %s27
      %p65 = scmp.eq.s32.totalorder %s64, 0
      %s67 = sadd.s32 %s66, 1
      %s68 = scalar_select %p65, %s66, %s67
      %p71 = pneg %p65
      %p72 = scmp.eq.s32.totalorder %s8, 1
      %p73 = por %p71, %p72
      %p74 = scmp.ne.s32.totalorder %s66, %s69
      %p75 = scmp.eq.s32.totalorder %s8, 0
      %p76 = por %p74, %p75
      %p77 = scmp.ne.s32.totalorder %s66, %s69
      %p78 = scmp.eq.s32.totalorder %s13, 1
      %p79 = por %p77, %p78
      %p80 = scmp.ne.s32.totalorder %s69, %s70
      %p81 = scmp.eq.s32.totalorder %s13, 0
      %p82 = por %p80, %p81
      %p83 = scmp.ne.s32.totalorder %s69, %s70
      %p84 = scmp.eq.s32.totalorder %s14, 1
      %p85 = por %p83, %p84
      %p87 = scmp.ne.s32.totalorder %s70, %s86
      %p88 = scmp.eq.s32.totalorder %s14, 0
      %p89 = por %p87, %p88
      %s90 = smul.u32 %s16, 2
      %s91 = ssub.s32 0, %s90
      %s92 = smul.u32 %s15, %s91
      %s93 = sadd.s32 %s16, %s92
      %s94 = smul.u32 %s23, 2
      %s95 = ssub.s32 0, %s94
      %s96 = smul.u32 %s27, %s95
      %s97 = sadd.s32 %s23, %s96
      %s98 = ssub.s32 %s15, %s27
      %s99 = ssub.s32 %s93, %s97
      %s100 = sor.u32 %s98, %s99
      %p101 = scmp.eq.s32.totalorder %s100, 0
      %s103 = sadd.s32 %s102, 1
      %s104 = scalar_select %p101, %s102, %s103
      %p107 = pneg %p101
      %p108 = scmp.eq.s32.totalorder %s8, 1
      %p109 = por %p107, %p108
      %p110 = scmp.ne.s32.totalorder %s102, %s105
      %p111 = scmp.eq.s32.totalorder %s8, 0
      %p112 = por %p110, %p111
      %p113 = scmp.ne.s32.totalorder %s102, %s105
      %p114 = scmp.eq.s32.totalorder %s13, 1
      %p115 = por %p113, %p114
      %p116 = scmp.ne.s32.totalorder %s105, %s106
      %p117 = scmp.eq.s32.totalorder %s13, 0
      %p118 = por %p116, %p117
      %p119 = scmp.ne.s32.totalorder %s105, %s106
      %p120 = scmp.eq.s32.totalorder %s14, 1
      %p121 = por %p119, %p120
      %p123 = scmp.ne.s32.totalorder %s106, %s122
      %p124 = scmp.eq.s32.totalorder %s14, 0
      %p125 = por %p123, %p124
      %p126 = scmp.le.s32.totalorder 1, %s8
      %p127 = scmp.lt.s32.totalorder %s8, 3
      %p128 = pnand %p126, %p127
      %p129 = pneg %p128
      // Predicated region
      $region9: #{net_forward.6} parent=5 // pred_check
        _
      $region10: #{net_forward.6} parent=5 // pred_check_branch
        %131 = sbr.rel (%p128) target = $region12
      $region11: #{net_forward.6} parent=5 // pred_region
        %s132 = ssub.s32 %s8, 1
      $region12: #{net_forward.6} parent=5 // pred_fallthru
        _
      %p133 = scmp.lt.s32.totalorder %s8, 2
      // Predicated region
      $region13: #{net_forward.6} parent=5 // pred_check
        %p134 = pneg %p133
      $region14: #{net_forward.6} parent=5 // pred_check_branch
        %136 = sbr.rel (%p134) target = $region16
      $region15: #{net_forward.6} parent=5 // pred_region
        // Predicated region
        $region17: #{net_forward.6} parent=15 // pred_check
          %p137 = pneg %p50
        $region18: #{net_forward.6} parent=15 // pred_check_branch
          %139 = sbr.rel (%p137) target = $region20
        $region19: #{net_forward.6} parent=15 // pred_region
          %s140 = sand.u32 %s40, 1
          %s141 = sand.u32 %s40, 1
          %s142 = smul.addr %s141, 8
          %s143 = scalar_lea.vmem [#allocation4], %s142
          %s144 = smul.u32 %s16, 2
          %s145 = ssub.s32 0, %s144
          %s146 = smul.u32 %s15, %s145
          %s147 = sadd.s32 %s16, %s146
          %s148 = smul.u32 8, %s147
          %s149 = smul.addr %s148, 2
          %s150 = sadd.s32 %s15, %s149
          %s151 = scalar_lea.vmem %s0, %s150
          // Predicated region
          $region21: #{net_forward.6} parent=19 // pred_check
            _
          $region22: #{net_forward.6} parent=19 // pred_check_branch
            %153 = sbr.rel (0) target = $region24
          $region23: #{net_forward.6} parent=19 // pred_region
            // Predicated region
            $region25: #{net_forward.6} parent=23 // pred_check
              _
            $region26: #{net_forward.6} parent=23 // pred_check_branch
              %155 = sbr.rel target = $region28
            $region27: #{net_forward.6} parent=23 // pred_region
              // Predicated region
              $region40: #{net_forward.6} parent=27 // pred_check
                _
              $region41: #{net_forward.6} parent=27 // pred_check_branch
                %184 = sbr.rel (0) target = $region43
              $region42: #{net_forward.6} parent=27 // pred_region
                loop: start=0, step=1, limit=1
                $region44: #{net_forward.6} parent=42 // loop_pre_header
                  _
                $region45: #{net_forward.6} parent=42 // loop_header
                  %s186 = sphi 0, %s190
                  %p187 = scmp.ge.s32.totalorder %s186, 1
                  %s191 = sphi %s151, %s151
                  %s192 = sphi %s143, %s143
                $region46: #{net_forward.6} parent=42 // loop_header_branch
                  %189 = sbr.rel (%p187) target = $region50
                $region47: #{net_forward.6} parent=42 // loop_body
                  _
                $region48: #{net_forward.6} parent=42 // loop_footer
                  %s190 = sadd.s32 1, %s186
                $region49: #{net_forward.6} parent=42 // loop_footer_branch
                  %185 = sbr.rel target = $region45
                $region50: #{net_forward.6} parent=42 // loop_exit
                  _
                loop: start=0, step=1, limit=1
                $region51: #{net_forward.6} parent=42 // loop_pre_header
                  _
                $region52: #{net_forward.6} parent=42 // loop_header
                  %s195 = sphi 0, %s199
                  %p196 = scmp.ge.s32.totalorder %s195, 1
                  %s200 = sphi %s151, %s151
                  %s201 = sphi %s143, %s143
                $region53: #{net_forward.6} parent=42 // loop_header_branch
                  %198 = sbr.rel (%p196) target = $region57
                $region54: #{net_forward.6} parent=42 // loop_body
                  %v202 = vld [vmem:[%s200] sm:$0x1]
                  %203 = vst [vmem:[%s201] sm:$0x1] %v202
                  %v204 = vld [vmem:[%s200 + $0x2] sm:$0x1]
                  %205 = vst [vmem:[%s201 + $0x1] sm:$0x1] %v204
                  %v206 = vld [vmem:[%s200 + $0x4] sm:$0x1]
                  %207 = vst [vmem:[%s201 + $0x2] sm:$0x1] %v206
                  %v208 = vld [vmem:[%s200 + $0x6] sm:$0x1]
                  %209 = vst [vmem:[%s201 + $0x3] sm:$0x1] %v208
                  %v210 = vld [vmem:[%s200 + $0x8] sm:$0x1]
                  %211 = vst [vmem:[%s201 + $0x4] sm:$0x1] %v210
                  %v212 = vld [vmem:[%s200 + $0xa] sm:$0x1]
                  %213 = vst [vmem:[%s201 + $0x5] sm:$0x1] %v212
                  %v214 = vld [vmem:[%s200 + $0xc] sm:$0x1]
                  %215 = vst [vmem:[%s201 + $0x6] sm:$0x1] %v214
                  %v216 = vld [vmem:[%s200 + $0xe] sm:$0x1]
                  %217 = vst [vmem:[%s201 + $0x7] sm:$0x1] %v216
                $region55: #{net_forward.6} parent=42 // loop_footer
                  %s199 = sadd.s32 1, %s195
                $region56: #{net_forward.6} parent=42 // loop_footer_branch
                  %194 = sbr.rel target = $region52
                $region57: #{net_forward.6} parent=42 // loop_exit
                  _
              $region43: #{net_forward.6} parent=27 // pred_fallthru
                _
            $region28: #{net_forward.6} parent=23 // pred_fallthru
              _
            // Predicated region
            $region29: #{net_forward.6} parent=23 // pred_check
              _
            $region30: #{net_forward.6} parent=23 // pred_check_branch
              %157 = sbr.rel (0) target = $region32
            $region31: #{net_forward.6} parent=23 // pred_region
              loop: start=0, step=1, limit=1
              $region33: #{net_forward.6} parent=31 // loop_pre_header
                _
              $region34: #{net_forward.6} parent=31 // loop_header
                %s160 = sphi 0, %s164
                %p161 = scmp.ge.s32.totalorder %s160, 1
                %s165 = sphi %s151, %s151
                %s166 = sphi %s143, %s143
              $region35: #{net_forward.6} parent=31 // loop_header_branch
                %163 = sbr.rel (%p161) target = $region39
              $region36: #{net_forward.6} parent=31 // loop_body
                %v167 = vld [vmem:[%s165] sm:$0x1]
                %168 = vst [vmem:[%s166] sm:$0x1] %v167
                %v169 = vld [vmem:[%s165 + $0x2] sm:$0x1]
                %170 = vst [vmem:[%s166 + $0x1] sm:$0x1] %v169
                %v171 = vld [vmem:[%s165 + $0x4] sm:$0x1]
                %172 = vst [vmem:[%s166 + $0x2] sm:$0x1] %v171
                %v173 = vld [vmem:[%s165 + $0x6] sm:$0x1]
                %174 = vst [vmem:[%s166 + $0x3] sm:$0x1] %v173
                %v175 = vld [vmem:[%s165 + $0x8] sm:$0x1]
                %176 = vst [vmem:[%s166 + $0x4] sm:$0x1] %v175
                %v177 = vld [vmem:[%s165 + $0xa] sm:$0x1]
                %178 = vst [vmem:[%s166 + $0x5] sm:$0x1] %v177
                %v179 = vld [vmem:[%s165 + $0xc] sm:$0x1]
                %180 = vst [vmem:[%s166 + $0x6] sm:$0x1] %v179
                %v181 = vld [vmem:[%s165 + $0xe] sm:$0x1]
                %182 = vst [vmem:[%s166 + $0x7] sm:$0x1] %v181
              $region37: #{net_forward.6} parent=31 // loop_footer
                %s164 = sadd.s32 1, %s160
              $region38: #{net_forward.6} parent=31 // loop_footer_branch
                %159 = sbr.rel target = $region34
              $region39: #{net_forward.6} parent=31 // loop_exit
                _
            $region32: #{net_forward.6} parent=23 // pred_fallthru
              _
          $region24: #{net_forward.6} parent=19 // pred_fallthru
            _
          %218 = vnop
        $region20: #{net_forward.6} parent=15 // pred_fallthru
          _
        // Predicated region
        $region58: #{net_forward.6} parent=15 // pred_check
          %p219 = pneg %p76
        $region59: #{net_forward.6} parent=15 // pred_check_branch
          %221 = sbr.rel (%p219) target = $region61
        $region60: #{net_forward.6} parent=15 // pred_region
          %p222 = scmp.lt.s32.totalorder %s15, 1
          %s223 = scalar_select %p222, %s15, 1
          %s224 = smul.addr %s223, 4
          %s225 = smul.addr %s224, 4
          %s226 = scalar_lea.vmem %s1, %s225
        $region61: #{net_forward.6} parent=15 // pred_fallthru
          _
      $region16: #{net_forward.6} parent=5 // pred_fallthru
        _
      %p227 = scmp.le.s32.totalorder 1, %s8
      %p228 = scmp.lt.s32.totalorder %s8, 3
      %p229 = pnand %p227, %p228
      %p230 = pneg %p229
      // Predicated region
      $region62: #{net_forward.6} parent=5 // pred_check
        _
      $region63: #{net_forward.6} parent=5 // pred_check_branch
        %232 = sbr.rel (%p229) target = $region65
      $region64: #{net_forward.6} parent=5 // pred_region
        %s233 = ssub.s32 %s8, 1
        %s234 = sand.u32 %s43, 1
        %s235 = sand.u32 %s43, 1
        %s236 = smul.addr %s235, 8
        %s237 = scalar_lea.vmem [#allocation4], %s236
        // Predicated region
        $region66: #{net_forward.6} parent=64 // pred_check
          %p238 = pneg %p56
        $region67: #{net_forward.6} parent=64 // pred_check_branch
          %240 = sbr.rel (%p238) target = $region69
        $region68: #{net_forward.6} parent=64 // pred_region
          _
        $region69: #{net_forward.6} parent=64 // pred_fallthru
          _
        %s241 = sand.u32 %s43, 1
        %s242 = sand.u32 %s43, 1
        %s243 = smul.addr %s242, 8
        %s244 = scalar_lea.vmem [#allocation4], %s243
        %p245 = pneg %p56
        %p246 = pneg %p53
        %p247 = scmp.lt.s32.totalorder %s17, 1
        %s248 = scalar_select %p247, %s17, 1
        %s249 = smul.addr %s248, 4
        %s250 = smul.addr %s249, 4
        %s251 = scalar_lea.vmem %s1, %s250
        %p252 = pneg %p82
        %p253 = pneg %p79
        %p254 = pneg %p118
        %p255 = pneg %p115
        %s256 = smul.u32 %s18, 2
        %s257 = ssub.s32 0, %s256
        %s258 = smul.u32 %s17, %s257
        %s259 = sadd.s32 %s18, %s258
        %s260 = smul.u32 8, %s259
        %p261 = scmp.lt.s32.totalorder %s17, 1
        %s262 = scalar_select %p261, %s17, 1
        %p263 = scmp.lt.s32.totalorder %s260, 7
        %s264 = scalar_select %p263, %s260, 7
        %s265 = smul.addr %s262, 8
        %s266 = sadd.s32 %s264, %s265
        %s267 = scalar_lea.vmem %s2, %s266
        %s268 = smul.u32 %s18, 2
        %s269 = ssub.s32 0, %s268
        %s270 = smul.u32 %s17, %s269
        %s271 = sadd.s32 %s18, %s270
        %s272 = smul.u32 8, %s271
        %p273 = scmp.lt.s32.totalorder %s17, 1
        %s274 = scalar_select %p273, %s17, 1
        %s275 = smul.addr %s274, 4
        %s276 = smul.addr %s275, 4
        %s277 = scalar_lea.vmem %s1, %s276
        %s278 = smul.u32 %s18, 2
        %s279 = ssub.s32 0, %s278
        %s280 = smul.u32 %s17, %s279
        %s281 = sadd.s32 %s18, %s280
        %s282 = smul.u32 8, %s281
        %p283 = scmp.lt.s32.totalorder %s17, 1
        %s284 = scalar_select %p283, %s17, 1
        %p285 = scmp.lt.s32.totalorder %s282, 7
        %s286 = scalar_select %p285, %s282, 7
        %s287 = smul.addr %s284, 8
        %s288 = sadd.s32 %s286, %s287
        %s289 = scalar_lea.vmem %s2, %s288
        %s290 = smul.u32 %s18, 2
        %s291 = ssub.s32 0, %s290
        %s292 = smul.u32 %s17, %s291
        %s293 = sadd.s32 %s18, %s292
        %s294 = smul.u32 8, %s293
        %p296 = scmp.eq.s32.totalorder %s18, 0
        // Predicated region
        $region70: #{net_forward.6} parent=64 // pred_check
          %p297 = pneg %p296
        $region71: #{net_forward.6} parent=64 // pred_check_branch
          %299 = sbr.rel (%p297) target = $region73
        $region72: #{net_forward.6} parent=64 // pred_region
          %vm300 = vcmask 254976
          %301 = vst.msk [vmem:[#allocation2] sm:$0x3] %vm300, 0.0
          %302 = vst.msk [vmem:[#allocation3] sm:$0x3] %vm300, 0.0
        $region73: #{net_forward.6} parent=64 // pred_fallthru
          _
        %v303 = vld [vmem:[%s277] sm:$0xf]
        %v304 = vld [vmem:[%s277 + $0x4] sm:$0xf]
        %v305 = vld [vmem:[%s277 + $0x8] sm:$0xf]
        %v306 = vld [vmem:[%s277 + $0xc] sm:$0xf]
        %s307 = smul.u32 %s17, 7
        %s308 = scalar_lea.vmem %s237, %s307 [#allocation4]
        %v309 = vld [vmem:[%s308] sm:$0x1]
        %v310 = vunpack.c.l.bf16 %v309
        %v311 = vld [vmem:[#allocation2] sm:$0x3]
        %v312 = vpack.c.bf16 %v311, %v311
        %v317 = vunpack.c.l.b16 %v303
        %v318 = vunpack.c.l.b16 %v304
        %v319 = vunpack.c.l.b16 %v305
        %v320 = vunpack.c.l.b16 %v306
        %v321 = vpack.c.b16 %v318, %v317
        %v322 = vpack.c.b16 %v320, %v319
        %vm325 = vcmask 261120
        %v327 = vsel %vm325, %v312, 0
        %329 = vmatprep.subr.bf16.mxu0 0
        %330 = vmatpush1.bf16.msra.mxu0 %v321
        %331 = vmatprep.subr.bf16.mxu0 0
        %332 = vmatpush1.bf16.msra.mxu0 %v322
        %333 = vmatprep.subr.bf16.mxu0 0
        %334 = vmatpush1.bf16.msra.mxu0 0
        %335 = vmatprep.subr.bf16.mxu0 0
        %336 = vmatpush1.bf16.msra.mxu0 0
        %337 = vmatprep.subr.bf16.mxu0 0
        %338 = vmatpush1.bf16.msra.mxu0 0
        %339 = vmatprep.subr.bf16.mxu0 0
        %340 = vmatpush1.bf16.msra.mxu0 0
        %341 = vmatprep.subr.bf16.mxu0 0
        %342 = vmatpush1.bf16.msra.mxu0 0
        %343 = vmatprep.subr.bf16.mxu0 0
        %344 = vmatpush1.bf16.msra.mxu0 0
        %345 = vmatprep.subr.bf16.mxu0 0
        %346 = vmatpush1.bf16.msra.mxu0 0
        %347 = vmatprep.subr.bf16.mxu0 0
        %348 = vmatpush1.bf16.msra.mxu0 0
        %349 = vmatprep.subr.bf16.mxu0 0
        %350 = vmatpush1.bf16.msra.mxu0 0
        %351 = vmatprep.subr.bf16.mxu0 0
        %352 = vmatpush1.bf16.msra.mxu0 0
        %353 = vmatprep.subr.bf16.mxu0 0
        %354 = vmatpush1.bf16.msra.mxu0 0
        %355 = vmatprep.subr.bf16.mxu0 0
        %356 = vmatpush1.bf16.msra.mxu0 0
        %357 = vmatprep.subr.bf16.mxu0 0
        %358 = vmatpush1.bf16.msra.mxu0 0
        %359 = vmatprep.subr.bf16.mxu0 0
        %360 = vmatpush1.bf16.msra.mxu0 0
        %361 = vmatprep.mubr.bf16.mxu0 0
        %362 = vmatmul.mubr.bf16.gmra.mrb[0].mxu0 %v327
        %v363 = vpop.f32.mrb[0].mxu0
        %v364 = vadd.f32 0.0, %v363
        %v365 = vpop.f32.mrb[0].mxu0
        %v366 = vpop.f32.mrb[0].mxu0
        %v367 = vpop.f32.mrb[0].mxu0
        %368 = vdwg.mxu0
        %v369 = vadd.f32 %v310, %v364
        %v370 = vxor.u32 %v369, 2147483648
        %v371 = vmul.f32 %v370, 1.442695
        %v372 = vpow.pop %v371
        %v373 = vadd.f32 %v372, 1.0
        %v374 = vrcp.pop %v373
        %v375 = vmul.f32 1.0, %v374
        %v376 = vtanh.pop %v369
        %v377 = vld [vmem:[#allocation3] sm:$0x3]
        %v380 = vunpack.c.l.s4 1983009808
        %v381 = vunpack.c.0.s8 %v380
        %v382 = vlaneseq
        %v383 = vshrl.u32 %v382, 7
        %v384 = vsub.s32 %v381, %v383
        %v385 = vrot.slane %v377, %v384
        %386 = vrot.lane.b32.xlu0 %v385, 32
        %v387 = vpop.permute.xlu0 %386
        %v389 = vmul.f32 %v375, %v387
        %391 = vrot.lane.b32.xlu0 %v376, 64
        %v392 = vpop.permute.xlu0 %391
        %v394 = vmul.f32 %v375, %v392
        %396 = vrot.lane.b32.xlu0 %v394, 32
        %v397 = vpop.permute.xlu0 %396
        %v399 = vadd.f32 %v389, %v397
        %v400 = vtanh.pop %v399
        %402 = vrot.lane.b32.xlu0 %v400, 64
        %v403 = vpop.permute.xlu0 %402
        %v405 = vmul.f32 %v375, %v403
        %v408 = vunpack.c.l.s4 1983009808
        %v409 = vunpack.c.0.s8 %v408
        %v410 = vlaneseq
        %v411 = vshrl.u32 %v410, 7
        %v412 = vsub.s32 %v409, %v411
        %v413 = vrot.slane %v399, %v412
        %414 = vrot.lane.b32.xlu0 %v413, 96
        %v415 = vpop.permute.xlu0 %414
        %vm417 = vcmask 254976
        %418 = vst.msk [vmem:[#allocation3] sm:$0x3] %vm417, %v415
        %v421 = vunpack.c.l.s4 1983009808
        %v422 = vunpack.c.0.s8 %v421
        %v423 = vlaneseq
        %v424 = vshrl.u32 %v423, 7
        %v425 = vsub.s32 %v422, %v424
        %v426 = vrot.slane %v405, %v425
        %427 = vrot.lane.b32.xlu0 %v426, 32
        %v428 = vpop.permute.xlu0 %427
        %430 = vst.msk [vmem:[#allocation2] sm:$0x3] %vm417, %v428
        %v431 = vpack.c.bf16 %v405, %v405
        %v434 = vunpack.c.l.s4 1966171168
        %v435 = vunpack.c.0.s8 %v434
        %v436 = vlaneseq
        %v437 = vshrl.u32 %v436, 7
        %v438 = vsub.s32 %v435, %v437
        %v439 = vrot.slane %v431, %v438
        %v441 = vunpack.c.l.s4 1966171168
        %v442 = vunpack.c.0.s8 %v441
        %v443 = vlaneseq
        %v444 = vshrl.u32 %v443, 7
        %v445 = vsub.s32 %v442, %v444
        %v446 = vrot.slane %v439, %v445
        %447 = vrot.lane.b32.xlu0 %v446, 32
        %v448 = vpop.permute.xlu0 %447
        %s450 = scalar_lea.vmem %s289, %s307
        %vm451 = vcmask 253952
        %452 = vst.msk [vmem:[%s450] sm:$0x1] %vm451, %v448
        %s453 = smul.u32 %s17, 5
        %s454 = sadd.s32 %s453, 1
        %s455 = scalar_lea.vmem %s237, %s454 [#allocation4]
        %v456 = vld [vmem:[%s455] sm:$0x1]
        %v457 = vunpack.c.l.bf16 %v456
        %v458 = vld [vmem:[#allocation2] sm:$0x3]
        %v459 = vpack.c.bf16 %v458, %v458
        %v461 = vsel %vm325, %v459, 0
        %463 = vmatprep.subr.bf16.mxu0 0
        %464 = vmatpush1.bf16.msra.mxu0 %v321
        %465 = vmatprep.subr.bf16.mxu0 0
        %466 = vmatpush1.bf16.msra.mxu0 %v322
        %467 = vmatprep.subr.bf16.mxu0 0
        %468 = vmatpush1.bf16.msra.mxu0 0
        %469 = vmatprep.subr.bf16.mxu0 0
        %470 = vmatpush1.bf16.msra.mxu0 0
        %471 = vmatprep.subr.bf16.mxu0 0
        %472 = vmatpush1.bf16.msra.mxu0 0
        %473 = vmatprep.subr.bf16.mxu0 0
        %474 = vmatpush1.bf16.msra.mxu0 0
        %475 = vmatprep.subr.bf16.mxu0 0
        %476 = vmatpush1.bf16.msra.mxu0 0
        %477 = vmatprep.subr.bf16.mxu0 0
        %478 = vmatpush1.bf16.msra.mxu0 0
        %479 = vmatprep.subr.bf16.mxu0 0
        %480 = vmatpush1.bf16.msra.mxu0 0
        %481 = vmatprep.subr.bf16.mxu0 0
        %482 = vmatpush1.bf16.msra.mxu0 0
        %483 = vmatprep.subr.bf16.mxu0 0
        %484 = vmatpush1.bf16.msra.mxu0 0
        %485 = vmatprep.subr.bf16.mxu0 0
        %486 = vmatpush1.bf16.msra.mxu0 0
        %487 = vmatprep.subr.bf16.mxu0 0
        %488 = vmatpush1.bf16.msra.mxu0 0
        %489 = vmatprep.subr.bf16.mxu0 0
        %490 = vmatpush1.bf16.msra.mxu0 0
        %491 = vmatprep.subr.bf16.mxu0 0
        %492 = vmatpush1.bf16.msra.mxu0 0
        %493 = vmatprep.subr.bf16.mxu0 0
        %494 = vmatpush1.bf16.msra.mxu0 0
        %495 = vmatprep.mubr.bf16.mxu0 0
        %496 = vmatmul.mubr.bf16.gmra.mrb[0].mxu0 %v461
        %v497 = vpop.f32.mrb[0].mxu0
        %v498 = vadd.f32 0.0, %v497
        %v499 = vpop.f32.mrb[0].mxu0
        %v500 = vpop.f32.mrb[0].mxu0
        %v501 = vpop.f32.mrb[0].mxu0
        %502 = vdwg.mxu0
        %v503 = vadd.f32 %v457, %v498
        %v504 = vxor.u32 %v503, 2147483648
        %v505 = vmul.f32 %v504, 1.442695
        %v506 = vpow.pop %v505
        %v507 = vadd.f32 %v506, 1.0
        %v508 = vrcp.pop %v507
        %v509 = vmul.f32 1.0, %v508
        %v510 = vtanh.pop %v503
        %v511 = vld [vmem:[#allocation3] sm:$0x3]
        %v514 = vunpack.c.l.s4 1983009808
        %v515 = vunpack.c.0.s8 %v514
        %v516 = vlaneseq
        %v517 = vshrl.u32 %v516, 7
        %v518 = vsub.s32 %v515, %v517
        %v519 = vrot.slane %v511, %v518
        %520 = vrot.lane.b32.xlu0 %v519, 32
        %v521 = vpop.permute.xlu0 %520
        %v523 = vmul.f32 %v509, %v521
        %525 = vrot.lane.b32.xlu0 %v510, 64
        %v526 = vpop.permute.xlu0 %525
        %v528 = vmul.f32 %v509, %v526
        %530 = vrot.lane.b32.xlu0 %v528, 32
        %v531 = vpop.permute.xlu0 %530
        %v533 = vadd.f32 %v523, %v531
        %v534 = vtanh.pop %v533
        %536 = vrot.lane.b32.xlu0 %v534, 64
        %v537 = vpop.permute.xlu0 %536
        %v539 = vmul.f32 %v509, %v537
        %v542 = vunpack.c.l.s4 1983009808
        %v543 = vunpack.c.0.s8 %v542
        %v544 = vlaneseq
        %v545 = vshrl.u32 %v544, 7
        %v546 = vsub.s32 %v543, %v545
        %v547 = vrot.slane %v533, %v546
        %548 = vrot.lane.b32.xlu0 %v547, 96
        %v549 = vpop.permute.xlu0 %548
        %551 = vst.msk [vmem:[#allocation3] sm:$0x3] %vm417, %v549
        %v554 = vunpack.c.l.s4 1983009808
        %v555 = vunpack.c.0.s8 %v554
        %v556 = vlaneseq
        %v557 = vshrl.u32 %v556, 7
        %v558 = vsub.s32 %v555, %v557
        %v559 = vrot.slane %v539, %v558
        %560 = vrot.lane.b32.xlu0 %v559, 32
        %v561 = vpop.permute.xlu0 %560
        %563 = vst.msk [vmem:[#allocation2] sm:$0x3] %vm417, %v561
        %v564 = vpack.c.bf16 %v539, %v539
        %v567 = vunpack.c.l.s4 1966171168
        %v568 = vunpack.c.0.s8 %v567
        %v569 = vlaneseq
        %v570 = vshrl.u32 %v569, 7
        %v571 = vsub.s32 %v568, %v570
        %v572 = vrot.slane %v564, %v571
        %v574 = vunpack.c.l.s4 1966171168
        %v575 = vunpack.c.0.s8 %v574
        %v576 = vlaneseq
        %v577 = vshrl.u32 %v576, 7
        %v578 = vsub.s32 %v575, %v577
        %v579 = vrot.slane %v572, %v578
        %580 = vrot.lane.b32.xlu0 %v579, 32
        %v581 = vpop.permute.xlu0 %580
        %s583 = scalar_lea.vmem %s289, %s454
        %584 = vst.msk [vmem:[%s583] sm:$0x1] %vm451, %v581
        %s585 = smul.u32 %s17, 3
        %s586 = sadd.s32 %s585, 2
        %s587 = scalar_lea.vmem %s237, %s586 [#allocation4]
        %v588 = vld [vmem:[%s587] sm:$0x1]
        %v589 = vunpack.c.l.bf16 %v588
        %v590 = vld [vmem:[#allocation2] sm:$0x3]
        %v591 = vpack.c.bf16 %v590, %v590
        %v593 = vsel %vm325, %v591, 0
        %595 = vmatprep.subr.bf16.mxu0 0
        %596 = vmatpush1.bf16.msra.mxu0 %v321
        %597 = vmatprep.subr.bf16.mxu0 0
        %598 = vmatpush1.bf16.msra.mxu0 %v322
        %599 = vmatprep.subr.bf16.mxu0 0
        %600 = vmatpush1.bf16.msra.mxu0 0
        %601 = vmatprep.subr.bf16.mxu0 0
        %602 = vmatpush1.bf16.msra.mxu0 0
        %603 = vmatprep.subr.bf16.mxu0 0
        %604 = vmatpush1.bf16.msra.mxu0 0
        %605 = vmatprep.subr.bf16.mxu0 0
        %606 = vmatpush1.bf16.msra.mxu0 0
        %607 = vmatprep.subr.bf16.mxu0 0
        %608 = vmatpush1.bf16.msra.mxu0 0
        %609 = vmatprep.subr.bf16.mxu0 0
        %610 = vmatpush1.bf16.msra.mxu0 0
        %611 = vmatprep.subr.bf16.mxu0 0
        %612 = vmatpush1.bf16.msra.mxu0 0
        %613 = vmatprep.subr.bf16.mxu0 0
        %614 = vmatpush1.bf16.msra.mxu0 0
        %615 = vmatprep.subr.bf16.mxu0 0
        %616 = vmatpush1.bf16.msra.mxu0 0
        %617 = vmatprep.subr.bf16.mxu0 0
        %618 = vmatpush1.bf16.msra.mxu0 0
        %619 = vmatprep.subr.bf16.mxu0 0
        %620 = vmatpush1.bf16.msra.mxu0 0
        %621 = vmatprep.subr.bf16.mxu0 0
        %622 = vmatpush1.bf16.msra.mxu0 0
        %623 = vmatprep.subr.bf16.mxu0 0
        %624 = vmatpush1.bf16.msra.mxu0 0
        %625 = vmatprep.subr.bf16.mxu0 0
        %626 = vmatpush1.bf16.msra.mxu0 0
        %627 = vmatprep.mubr.bf16.mxu0 0
        %628 = vmatmul.mubr.bf16.gmra.mrb[0].mxu0 %v593
        %v629 = vpop.f32.mrb[0].mxu0
        %v630 = vadd.f32 0.0, %v629
        %v631 = vpop.f32.mrb[0].mxu0
        %v632 = vpop.f32.mrb[0].mxu0
        %v633 = vpop.f32.mrb[0].mxu0
        %634 = vdwg.mxu0
        %v635 = vadd.f32 %v589, %v630
        %v636 = vxor.u32 %v635, 2147483648
        %v637 = vmul.f32 %v636, 1.442695
        %v638 = vpow.pop %v637
        %v639 = vadd.f32 %v638, 1.0
        %v640 = vrcp.pop %v639
        %v641 = vmul.f32 1.0, %v640
        %v642 = vtanh.pop %v635
        %v643 = vld [vmem:[#allocation3] sm:$0x3]
        %v646 = vunpack.c.l.s4 1983009808
        %v647 = vunpack.c.0.s8 %v646
        %v648 = vlaneseq
        %v649 = vshrl.u32 %v648, 7
        %v650 = vsub.s32 %v647, %v649
        %v651 = vrot.slane %v643, %v650
        %652 = vrot.lane.b32.xlu0 %v651, 32
        %v653 = vpop.permute.xlu0 %652
        %v655 = vmul.f32 %v641, %v653
        %657 = vrot.lane.b32.xlu0 %v642, 64
        %v658 = vpop.permute.xlu0 %657
        %v660 = vmul.f32 %v641, %v658
        %662 = vrot.lane.b32.xlu0 %v660, 32
        %v663 = vpop.permute.xlu0 %662
        %v665 = vadd.f32 %v655, %v663
        %v666 = vtanh.pop %v665
        %668 = vrot.lane.b32.xlu0 %v666, 64
        %v669 = vpop.permute.xlu0 %668
        %v671 = vmul.f32 %v641, %v669
        %v674 = vunpack.c.l.s4 1983009808
        %v675 = vunpack.c.0.s8 %v674
        %v676 = vlaneseq
        %v677 = vshrl.u32 %v676, 7
        %v678 = vsub.s32 %v675, %v677
        %v679 = vrot.slane %v665, %v678
        %680 = vrot.lane.b32.xlu0 %v679, 96
        %v681 = vpop.permute.xlu0 %680
        %683 = vst.msk [vmem:[#allocation3] sm:$0x3] %vm417, %v681
        %v686 = vunpack.c.l.s4 1983009808
        %v687 = vunpack.c.0.s8 %v686
        %v688 = vlaneseq
        %v689 = vshrl.u32 %v688, 7
        %v690 = vsub.s32 %v687, %v689
        %v691 = vrot.slane %v671, %v690
        %692 = vrot.lane.b32.xlu0 %v691, 32
        %v693 = vpop.permute.xlu0 %692
        %695 = vst.msk [vmem:[#allocation2] sm:$0x3] %vm417, %v693
        %v696 = vpack.c.bf16 %v671, %v671
        %v699 = vunpack.c.l.s4 1966171168
        %v700 = vunpack.c.0.s8 %v699
        %v701 = vlaneseq
        %v702 = vshrl.u32 %v701, 7
        %v703 = vsub.s32 %v700, %v702
        %v704 = vrot.slane %v696, %v703
        %v706 = vunpack.c.l.s4 1966171168
        %v707 = vunpack.c.0.s8 %v706
        %v708 = vlaneseq
        %v709 = vshrl.u32 %v708, 7
        %v710 = vsub.s32 %v707, %v709
        %v711 = vrot.slane %v704, %v710
        %712 = vrot.lane.b32.xlu0 %v711, 32
        %v713 = vpop.permute.xlu0 %712
        %s715 = scalar_lea.vmem %s289, %s586
        %716 = vst.msk [vmem:[%s715] sm:$0x1] %vm451, %v713
        %s717 = sadd.s32 %s17, 3
        %s718 = scalar_lea.vmem %s237, %s717 [#allocation4]
        %v719 = vld [vmem:[%s718] sm:$0x1]
        %v720 = vunpack.c.l.bf16 %v719
        %v721 = vld [vmem:[#allocation2] sm:$0x3]
        %v722 = vpack.c.bf16 %v721, %v721
        %v724 = vsel %vm325, %v722, 0
        %726 = vmatprep.subr.bf16.mxu0 0
        %727 = vmatpush1.bf16.msra.mxu0 %v321
        %728 = vmatprep.subr.bf16.mxu0 0
        %729 = vmatpush1.bf16.msra.mxu0 %v322
        %730 = vmatprep.subr.bf16.mxu0 0
        %731 = vmatpush1.bf16.msra.mxu0 0
        %732 = vmatprep.subr.bf16.mxu0 0
        %733 = vmatpush1.bf16.msra.mxu0 0
        %734 = vmatprep.subr.bf16.mxu0 0
        %735 = vmatpush1.bf16.msra.mxu0 0
        %736 = vmatprep.subr.bf16.mxu0 0
        %737 = vmatpush1.bf16.msra.mxu0 0
        %738 = vmatprep.subr.bf16.mxu0 0
        %739 = vmatpush1.bf16.msra.mxu0 0
        %740 = vmatprep.subr.bf16.mxu0 0
        %741 = vmatpush1.bf16.msra.mxu0 0
        %742 = vmatprep.subr.bf16.mxu0 0
        %743 = vmatpush1.bf16.msra.mxu0 0
        %744 = vmatprep.subr.bf16.mxu0 0
        %745 = vmatpush1.bf16.msra.mxu0 0
        %746 = vmatprep.subr.bf16.mxu0 0
        %747 = vmatpush1.bf16.msra.mxu0 0
        %748 = vmatprep.subr.bf16.mxu0 0
        %749 = vmatpush1.bf16.msra.mxu0 0
        %750 = vmatprep.subr.bf16.mxu0 0
        %751 = vmatpush1.bf16.msra.mxu0 0
        %752 = vmatprep.subr.bf16.mxu0 0
        %753 = vmatpush1.bf16.msra.mxu0 0
        %754 = vmatprep.subr.bf16.mxu0 0
        %755 = vmatpush1.bf16.msra.mxu0 0
        %756 = vmatprep.subr.bf16.mxu0 0
        %757 = vmatpush1.bf16.msra.mxu0 0
        %758 = vmatprep.mubr.bf16.mxu0 0
        %759 = vmatmul.mubr.bf16.gmra.mrb[0].mxu0 %v724
        %v760 = vpop.f32.mrb[0].mxu0
        %v761 = vadd.f32 0.0, %v760
        %v762 = vpop.f32.mrb[0].mxu0
        %v763 = vpop.f32.mrb[0].mxu0
        %v764 = vpop.f32.mrb[0].mxu0
        %765 = vdwg.mxu0
        %v766 = vadd.f32 %v720, %v761
        %v767 = vxor.u32 %v766, 2147483648
        %v768 = vmul.f32 %v767, 1.442695
        %v769 = vpow.pop %v768
        %v770 = vadd.f32 %v769, 1.0
        %v771 = vrcp.pop %v770
        %v772 = vmul.f32 1.0, %v771
        %v773 = vtanh.pop %v766
        %v774 = vld [vmem:[#allocation3] sm:$0x3]
        %v777 = vunpack.c.l.s4 1983009808
        %v778 = vunpack.c.0.s8 %v777
        %v779 = vlaneseq
        %v780 = vshrl.u32 %v779, 7
        %v781 = vsub.s32 %v778, %v780
        %v782 = vrot.slane %v774, %v781
        %783 = vrot.lane.b32.xlu0 %v782, 32
        %v784 = vpop.permute.xlu0 %783
        %v786 = vmul.f32 %v772, %v784
        %788 = vrot.lane.b32.xlu0 %v773, 64
        %v789 = vpop.permute.xlu0 %788
        %v791 = vmul.f32 %v772, %v789
        %793 = vrot.lane.b32.xlu0 %v791, 32
        %v794 = vpop.permute.xlu0 %793
        %v796 = vadd.f32 %v786, %v794
        %v797 = vtanh.pop %v796
        %799 = vrot.lane.b32.xlu0 %v797, 64
        %v800 = vpop.permute.xlu0 %799
        %v802 = vmul.f32 %v772, %v800
        %v805 = vunpack.c.l.s4 1983009808
        %v806 = vunpack.c.0.s8 %v805
        %v807 = vlaneseq
        %v808 = vshrl.u32 %v807, 7
        %v809 = vsub.s32 %v806, %v808
        %v810 = vrot.slane %v796, %v809
        %811 = vrot.lane.b32.xlu0 %v810, 96
        %v812 = vpop.permute.xlu0 %811
        %814 = vst.msk [vmem:[#allocation3] sm:$0x3] %vm417, %v812
        %v817 = vunpack.c.l.s4 1983009808
        %v818 = vunpack.c.0.s8 %v817
        %v819 = vlaneseq
        %v820 = vshrl.u32 %v819, 7
        %v821 = vsub.s32 %v818, %v820
        %v822 = vrot.slane %v802, %v821
        %823 = vrot.lane.b32.xlu0 %v822, 32
        %v824 = vpop.permute.xlu0 %823
        %826 = vst.msk [vmem:[#allocation2] sm:$0x3] %vm417, %v824
        %v827 = vpack.c.bf16 %v802, %v802
        %v830 = vunpack.c.l.s4 1966171168
        %v831 = vunpack.c.0.s8 %v830
        %v832 = vlaneseq
        %v833 = vshrl.u32 %v832, 7
        %v834 = vsub.s32 %v831, %v833
        %v835 = vrot.slane %v827, %v834
        %v837 = vunpack.c.l.s4 1966171168
        %v838 = vunpack.c.0.s8 %v837
        %v839 = vlaneseq
        %v840 = vshrl.u32 %v839, 7
        %v841 = vsub.s32 %v838, %v840
        %v842 = vrot.slane %v835, %v841
        %843 = vrot.lane.b32.xlu0 %v842, 32
        %v844 = vpop.permute.xlu0 %843
        %s846 = scalar_lea.vmem %s289, %s717
        %847 = vst.msk [vmem:[%s846] sm:$0x1] %vm451, %v844
        %s848 = ssub.s32 4, %s17
        %s849 = scalar_lea.vmem %s237, %s848 [#allocation4]
        %v850 = vld [vmem:[%s849] sm:$0x1]
        %v851 = vunpack.c.l.bf16 %v850
        %v852 = vld [vmem:[#allocation2] sm:$0x3]
        %v853 = vpack.c.bf16 %v852, %v852
        %v855 = vsel %vm325, %v853, 0
        %857 = vmatprep.subr.bf16.mxu0 0
        %858 = vmatpush1.bf16.msra.mxu0 %v321
        %859 = vmatprep.subr.bf16.mxu0 0
        %860 = vmatpush1.bf16.msra.mxu0 %v322
        %861 = vmatprep.subr.bf16.mxu0 0
        %862 = vmatpush1.bf16.msra.mxu0 0
        %863 = vmatprep.subr.bf16.mxu0 0
        %864 = vmatpush1.bf16.msra.mxu0 0
        %865 = vmatprep.subr.bf16.mxu0 0
        %866 = vmatpush1.bf16.msra.mxu0 0
        %867 = vmatprep.subr.bf16.mxu0 0
        %868 = vmatpush1.bf16.msra.mxu0 0
        %869 = vmatprep.subr.bf16.mxu0 0
        %870 = vmatpush1.bf16.msra.mxu0 0
        %871 = vmatprep.subr.bf16.mxu0 0
        %872 = vmatpush1.bf16.msra.mxu0 0
        %873 = vmatprep.subr.bf16.mxu0 0
        %874 = vmatpush1.bf16.msra.mxu0 0
        %875 = vmatprep.subr.bf16.mxu0 0
        %876 = vmatpush1.bf16.msra.mxu0 0
        %877 = vmatprep.subr.bf16.mxu0 0
        %878 = vmatpush1.bf16.msra.mxu0 0
        %879 = vmatprep.subr.bf16.mxu0 0
        %880 = vmatpush1.bf16.msra.mxu0 0
        %881 = vmatprep.subr.bf16.mxu0 0
        %882 = vmatpush1.bf16.msra.mxu0 0
        %883 = vmatprep.subr.bf16.mxu0 0
        %884 = vmatpush1.bf16.msra.mxu0 0
        %885 = vmatprep.subr.bf16.mxu0 0
        %886 = vmatpush1.bf16.msra.mxu0 0
        %887 = vmatprep.subr.bf16.mxu0 0
        %888 = vmatpush1.bf16.msra.mxu0 0
        %889 = vmatprep.mubr.bf16.mxu0 0
        %890 = vmatmul.mubr.bf16.gmra.mrb[0].mxu0 %v855
        %v891 = vpop.f32.mrb[0].mxu0
        %v892 = vadd.f32 0.0, %v891
        %v893 = vpop.f32.mrb[0].mxu0
        %v894 = vpop.f32.mrb[0].mxu0
        %v895 = vpop.f32.mrb[0].mxu0
        %896 = vdwg.mxu0
        %v897 = vadd.f32 %v851, %v892
        %v898 = vxor.u32 %v897, 2147483648
        %v899 = vmul.f32 %v898, 1.442695
        %v900 = vpow.pop %v899
        %v901 = vadd.f32 %v900, 1.0
        %v902 = vrcp.pop %v901
        %v903 = vmul.f32 1.0, %v902
        %v904 = vtanh.pop %v897
        %v905 = vld [vmem:[#allocation3] sm:$0x3]
        %v908 = vunpack.c.l.s4 1983009808
        %v909 = vunpack.c.0.s8 %v908
        %v910 = vlaneseq
        %v911 = vshrl.u32 %v910, 7
        %v912 = vsub.s32 %v909, %v911
        %v913 = vrot.slane %v905, %v912
        %914 = vrot.lane.b32.xlu0 %v913, 32
        %v915 = vpop.permute.xlu0 %914
        %v917 = vmul.f32 %v903, %v915
        %919 = vrot.lane.b32.xlu0 %v904, 64
        %v920 = vpop.permute.xlu0 %919
        %v922 = vmul.f32 %v903, %v920
        %924 = vrot.lane.b32.xlu0 %v922, 32
        %v925 = vpop.permute.xlu0 %924
        %v927 = vadd.f32 %v917, %v925
        %v928 = vtanh.pop %v927
        %930 = vrot.lane.b32.xlu0 %v928, 64
        %v931 = vpop.permute.xlu0 %930
        %v933 = vmul.f32 %v903, %v931
        %v936 = vunpack.c.l.s4 1983009808
        %v937 = vunpack.c.0.s8 %v936
        %v938 = vlaneseq
        %v939 = vshrl.u32 %v938, 7
        %v940 = vsub.s32 %v937, %v939
        %v941 = vrot.slane %v927, %v940
        %942 = vrot.lane.b32.xlu0 %v941, 96
        %v943 = vpop.permute.xlu0 %942
        %945 = vst.msk [vmem:[#allocation3] sm:$0x3] %vm417, %v943
        %v948 = vunpack.c.l.s4 1983009808
        %v949 = vunpack.c.0.s8 %v948
        %v950 = vlaneseq
        %v951 = vshrl.u32 %v950, 7
        %v952 = vsub.s32 %v949, %v951
        %v953 = vrot.slane %v933, %v952
        %954 = vrot.lane.b32.xlu0 %v953, 32
        %v955 = vpop.permute.xlu0 %954
        %957 = vst.msk [vmem:[#allocation2] sm:$0x3] %vm417, %v955
        %v958 = vpack.c.bf16 %v933, %v933
        %v961 = vunpack.c.l.s4 1966171168
        %v962 = vunpack.c.0.s8 %v961
        %v963 = vlaneseq
        %v964 = vshrl.u32 %v963, 7
        %v965 = vsub.s32 %v962, %v964
        %v966 = vrot.slane %v958, %v965
        %v968 = vunpack.c.l.s4 1966171168
        %v969 = vunpack.c.0.s8 %v968
        %v970 = vlaneseq
        %v971 = vshrl.u32 %v970, 7
        %v972 = vsub.s32 %v969, %v971
        %v973 = vrot.slane %v966, %v972
        %974 = vrot.lane.b32.xlu0 %v973, 32
        %v975 = vpop.permute.xlu0 %974
        %s977 = scalar_lea.vmem %s289, %s848
        %978 = vst.msk [vmem:[%s977] sm:$0x1] %vm451, %v975
        %s979 = smul.u32 %s17, 4294967293
        %s980 = sadd.s32 %s979, 5
        %s981 = scalar_lea.vmem %s237, %s980 [#allocation4]
        %v982 = vld [vmem:[%s981] sm:$0x1]
        %v983 = vunpack.c.l.bf16 %v982
        %v984 = vld [vmem:[#allocation2] sm:$0x3]
        %v985 = vpack.c.bf16 %v984, %v984
        %v987 = vsel %vm325, %v985, 0
        %989 = vmatprep.subr.bf16.mxu0 0
        %990 = vmatpush1.bf16.msra.mxu0 %v321
        %991 = vmatprep.subr.bf16.mxu0 0
        %992 = vmatpush1.bf16.msra.mxu0 %v322
        %993 = vmatprep.subr.bf16.mxu0 0
        %994 = vmatpush1.bf16.msra.mxu0 0
        %995 = vmatprep.subr.bf16.mxu0 0
        %996 = vmatpush1.bf16.msra.mxu0 0
        %997 = vmatprep.subr.bf16.mxu0 0
        %998 = vmatpush1.bf16.msra.mxu0 0
        %999 = vmatprep.subr.bf16.mxu0 0
        %1000 = vmatpush1.bf16.msra.mxu0 0
        %1001 = vmatprep.subr.bf16.mxu0 0
        %1002 = vmatpush1.bf16.msra.mxu0 0
        %1003 = vmatprep.subr.bf16.mxu0 0
        %1004 = vmatpush1.bf16.msra.mxu0 0
        %1005 = vmatprep.subr.bf16.mxu0 0
        %1006 = vmatpush1.bf16.msra.mxu0 0
        %1007 = vmatprep.subr.bf16.mxu0 0
        %1008 = vmatpush1.bf16.msra.mxu0 0
        %1009 = vmatprep.subr.bf16.mxu0 0
        %1010 = vmatpush1.bf16.msra.mxu0 0
        %1011 = vmatprep.subr.bf16.mxu0 0
        %1012 = vmatpush1.bf16.msra.mxu0 0
        %1013 = vmatprep.subr.bf16.mxu0 0
        %1014 = vmatpush1.bf16.msra.mxu0 0
        %1015 = vmatprep.subr.bf16.mxu0 0
        %1016 = vmatpush1.bf16.msra.mxu0 0
        %1017 = vmatprep.subr.bf16.mxu0 0
        %1018 = vmatpush1.bf16.msra.mxu0 0
        %1019 = vmatprep.subr.bf16.mxu0 0
        %1020 = vmatpush1.bf16.msra.mxu0 0
        %1021 = vmatprep.mubr.bf16.mxu0 0
        %1022 = vmatmul.mubr.bf16.gmra.mrb[0].mxu0 %v987
        %v1023 = vpop.f32.mrb[0].mxu0
        %v1024 = vadd.f32 0.0, %v1023
        %v1025 = vpop.f32.mrb[0].mxu0
        %v1026 = vpop.f32.mrb[0].mxu0
        %v1027 = vpop.f32.mrb[0].mxu0
        %1028 = vdwg.mxu0
        %v1029 = vadd.f32 %v983, %v1024
        %v1030 = vxor.u32 %v1029, 2147483648
        %v1031 = vmul.f32 %v1030, 1.442695
        %v1032 = vpow.pop %v1031
        %v1033 = vadd.f32 %v1032, 1.0
        %v1034 = vrcp.pop %v1033
        %v1035 = vmul.f32 1.0, %v1034
        %v1036 = vtanh.pop %v1029
        %v1037 = vld [vmem:[#allocation3] sm:$0x3]
        %v1040 = vunpack.c.l.s4 1983009808
        %v1041 = vunpack.c.0.s8 %v1040
        %v1042 = vlaneseq
        %v1043 = vshrl.u32 %v1042, 7
        %v1044 = vsub.s32 %v1041, %v1043
        %v1045 = vrot.slane %v1037, %v1044
        %1046 = vrot.lane.b32.xlu0 %v1045, 32
        %v1047 = vpop.permute.xlu0 %1046
        %v1049 = vmul.f32 %v1035, %v1047
        %1051 = vrot.lane.b32.xlu0 %v1036, 64
        %v1052 = vpop.permute.xlu0 %1051
        %v1054 = vmul.f32 %v1035, %v1052
        %1056 = vrot.lane.b32.xlu0 %v1054, 32
        %v1057 = vpop.permute.xlu0 %1056
        %v1059 = vadd.f32 %v1049, %v1057
        %v1060 = vtanh.pop %v1059
        %1062 = vrot.lane.b32.xlu0 %v1060, 64
        %v1063 = vpop.permute.xlu0 %1062
        %v1065 = vmul.f32 %v1035, %v1063
        %v1068 = vunpack.c.l.s4 1983009808
        %v1069 = vunpack.c.0.s8 %v1068
        %v1070 = vlaneseq
        %v1071 = vshrl.u32 %v1070, 7
        %v1072 = vsub.s32 %v1069, %v1071
        %v1073 = vrot.slane %v1059, %v1072
        %1074 = vrot.lane.b32.xlu0 %v1073, 96
        %v1075 = vpop.permute.xlu0 %1074
        %1077 = vst.msk [vmem:[#allocation3] sm:$0x3] %vm417, %v1075
        %v1080 = vunpack.c.l.s4 1983009808
        %v1081 = vunpack.c.0.s8 %v1080
        %v1082 = vlaneseq
        %v1083 = vshrl.u32 %v1082, 7
        %v1084 = vsub.s32 %v1081, %v1083
        %v1085 = vrot.slane %v1065, %v1084
        %1086 = vrot.lane.b32.xlu0 %v1085, 32
        %v1087 = vpop.permute.xlu0 %1086
        %1089 = vst.msk [vmem:[#allocation2] sm:$0x3] %vm417, %v1087
        %v1090 = vpack.c.bf16 %v1065, %v1065
        %v1093 = vunpack.c.l.s4 1966171168
        %v1094 = vunpack.c.0.s8 %v1093
        %v1095 = vlaneseq
        %v1096 = vshrl.u32 %v1095, 7
        %v1097 = vsub.s32 %v1094, %v1096
        %v1098 = vrot.slane %v1090, %v1097
        %v1100 = vunpack.c.l.s4 1966171168
        %v1101 = vunpack.c.0.s8 %v1100
        %v1102 = vlaneseq
        %v1103 = vshrl.u32 %v1102, 7
        %v1104 = vsub.s32 %v1101, %v1103
        %v1105 = vrot.slane %v1098, %v1104
        %1106 = vrot.lane.b32.xlu0 %v1105, 32
        %v1107 = vpop.permute.xlu0 %1106
        %s1109 = scalar_lea.vmem %s289, %s980
        %1110 = vst.msk [vmem:[%s1109] sm:$0x1] %vm451, %v1107
        %s1111 = smul.u32 %s17, 4294967291
        %s1112 = sadd.s32 %s1111, 6
        %s1113 = scalar_lea.vmem %s237, %s1112 [#allocation4]
        %v1114 = vld [vmem:[%s1113] sm:$0x1]
        %v1115 = vunpack.c.l.bf16 %v1114
        %v1116 = vld [vmem:[#allocation2] sm:$0x3]
        %v1117 = vpack.c.bf16 %v1116, %v1116
        %v1119 = vsel %vm325, %v1117, 0
        %1121 = vmatprep.subr.bf16.mxu0 0
        %1122 = vmatpush1.bf16.msra.mxu0 %v321
        %1123 = vmatprep.subr.bf16.mxu0 0
        %1124 = vmatpush1.bf16.msra.mxu0 %v322
        %1125 = vmatprep.subr.bf16.mxu0 0
        %1126 = vmatpush1.bf16.msra.mxu0 0
        %1127 = vmatprep.subr.bf16.mxu0 0
        %1128 = vmatpush1.bf16.msra.mxu0 0
        %1129 = vmatprep.subr.bf16.mxu0 0
        %1130 = vmatpush1.bf16.msra.mxu0 0
        %1131 = vmatprep.subr.bf16.mxu0 0
        %1132 = vmatpush1.bf16.msra.mxu0 0
        %1133 = vmatprep.subr.bf16.mxu0 0
        %1134 = vmatpush1.bf16.msra.mxu0 0
        %1135 = vmatprep.subr.bf16.mxu0 0
        %1136 = vmatpush1.bf16.msra.mxu0 0
        %1137 = vmatprep.subr.bf16.mxu0 0
        %1138 = vmatpush1.bf16.msra.mxu0 0
        %1139 = vmatprep.subr.bf16.mxu0 0
        %1140 = vmatpush1.bf16.msra.mxu0 0
        %1141 = vmatprep.subr.bf16.mxu0 0
        %1142 = vmatpush1.bf16.msra.mxu0 0
        %1143 = vmatprep.subr.bf16.mxu0 0
        %1144 = vmatpush1.bf16.msra.mxu0 0
        %1145 = vmatprep.subr.bf16.mxu0 0
        %1146 = vmatpush1.bf16.msra.mxu0 0
        %1147 = vmatprep.subr.bf16.mxu0 0
        %1148 = vmatpush1.bf16.msra.mxu0 0
        %1149 = vmatprep.subr.bf16.mxu0 0
        %1150 = vmatpush1.bf16.msra.mxu0 0
        %1151 = vmatprep.subr.bf16.mxu0 0
        %1152 = vmatpush1.bf16.msra.mxu0 0
        %1153 = vmatprep.mubr.bf16.mxu0 0
        %1154 = vmatmul.mubr.bf16.gmra.mrb[0].mxu0 %v1119
        %v1155 = vpop.f32.mrb[0].mxu0
        %v1156 = vadd.f32 0.0, %v1155
        %v1157 = vpop.f32.mrb[0].mxu0
        %v1158 = vpop.f32.mrb[0].mxu0
        %v1159 = vpop.f32.mrb[0].mxu0
        %1160 = vdwg.mxu0
        %v1161 = vadd.f32 %v1115, %v1156
        %v1162 = vxor.u32 %v1161, 2147483648
        %v1163 = vmul.f32 %v1162, 1.442695
        %v1164 = vpow.pop %v1163
        %v1165 = vadd.f32 %v1164, 1.0
        %v1166 = vrcp.pop %v1165
        %v1167 = vmul.f32 1.0, %v1166
        %v1168 = vtanh.pop %v1161
        %v1169 = vld [vmem:[#allocation3] sm:$0x3]
        %v1172 = vunpack.c.l.s4 1983009808
        %v1173 = vunpack.c.0.s8 %v1172
        %v1174 = vlaneseq
        %v1175 = vshrl.u32 %v1174, 7
        %v1176 = vsub.s32 %v1173, %v1175
        %v1177 = vrot.slane %v1169, %v1176
        %1178 = vrot.lane.b32.xlu0 %v1177, 32
        %v1179 = vpop.permute.xlu0 %1178
        %v1181 = vmul.f32 %v1167, %v1179
        %1183 = vrot.lane.b32.xlu0 %v1168, 64
        %v1184 = vpop.permute.xlu0 %1183
        %v1186 = vmul.f32 %v1167, %v1184
        %1188 = vrot.lane.b32.xlu0 %v1186, 32
        %v1189 = vpop.permute.xlu0 %1188
        %v1191 = vadd.f32 %v1181, %v1189
        %v1192 = vtanh.pop %v1191
        %1194 = vrot.lane.b32.xlu0 %v1192, 64
        %v1195 = vpop.permute.xlu0 %1194
        %v1197 = vmul.f32 %v1167, %v1195
        %v1200 = vunpack.c.l.s4 1983009808
        %v1201 = vunpack.c.0.s8 %v1200
        %v1202 = vlaneseq
        %v1203 = vshrl.u32 %v1202, 7
        %v1204 = vsub.s32 %v1201, %v1203
        %v1205 = vrot.slane %v1191, %v1204
        %1206 = vrot.lane.b32.xlu0 %v1205, 96
        %v1207 = vpop.permute.xlu0 %1206
        %1209 = vst.msk [vmem:[#allocation3] sm:$0x3] %vm417, %v1207
        %v1212 = vunpack.c.l.s4 1983009808
        %v1213 = vunpack.c.0.s8 %v1212
        %v1214 = vlaneseq
        %v1215 = vshrl.u32 %v1214, 7
        %v1216 = vsub.s32 %v1213, %v1215
        %v1217 = vrot.slane %v1197, %v1216
        %1218 = vrot.lane.b32.xlu0 %v1217, 32
        %v1219 = vpop.permute.xlu0 %1218
        %1221 = vst.msk [vmem:[#allocation2] sm:$0x3] %vm417, %v1219
        %v1222 = vpack.c.bf16 %v1197, %v1197
        %v1225 = vunpack.c.l.s4 1966171168
        %v1226 = vunpack.c.0.s8 %v1225
        %v1227 = vlaneseq
        %v1228 = vshrl.u32 %v1227, 7
        %v1229 = vsub.s32 %v1226, %v1228
        %v1230 = vrot.slane %v1222, %v1229
        %v1232 = vunpack.c.l.s4 1966171168
        %v1233 = vunpack.c.0.s8 %v1232
        %v1234 = vlaneseq
        %v1235 = vshrl.u32 %v1234, 7
        %v1236 = vsub.s32 %v1233, %v1235
        %v1237 = vrot.slane %v1230, %v1236
        %1238 = vrot.lane.b32.xlu0 %v1237, 32
        %v1239 = vpop.permute.xlu0 %1238
        %s1241 = scalar_lea.vmem %s289, %s1112
        %1242 = vst.msk [vmem:[%s1241] sm:$0x1] %vm451, %v1239
        %s1243 = smul.u32 %s17, 4294967289
        %s1244 = sadd.s32 %s1243, 7
        %s1245 = scalar_lea.vmem %s237, %s1244 [#allocation4]
        %v1246 = vld [vmem:[%s1245] sm:$0x1]
        %v1247 = vunpack.c.l.bf16 %v1246
        %v1248 = vld [vmem:[#allocation2] sm:$0x3]
        %v1249 = vpack.c.bf16 %v1248, %v1248
        %v1251 = vsel %vm325, %v1249, 0
        %1253 = vmatprep.subr.bf16.mxu0 0
        %1254 = vmatpush1.bf16.msra.mxu0 %v321
        %1255 = vmatprep.subr.bf16.mxu0 0
        %1256 = vmatpush1.bf16.msra.mxu0 %v322
        %1257 = vmatprep.subr.bf16.mxu0 0
        %1258 = vmatpush1.bf16.msra.mxu0 0
        %1259 = vmatprep.subr.bf16.mxu0 0
        %1260 = vmatpush1.bf16.msra.mxu0 0
        %1261 = vmatprep.subr.bf16.mxu0 0
        %1262 = vmatpush1.bf16.msra.mxu0 0
        %1263 = vmatprep.subr.bf16.mxu0 0
        %1264 = vmatpush1.bf16.msra.mxu0 0
        %1265 = vmatprep.subr.bf16.mxu0 0
        %1266 = vmatpush1.bf16.msra.mxu0 0
        %1267 = vmatprep.subr.bf16.mxu0 0
        %1268 = vmatpush1.bf16.msra.mxu0 0
        %1269 = vmatprep.subr.bf16.mxu0 0
        %1270 = vmatpush1.bf16.msra.mxu0 0
        %1271 = vmatprep.subr.bf16.mxu0 0
        %1272 = vmatpush1.bf16.msra.mxu0 0
        %1273 = vmatprep.subr.bf16.mxu0 0
        %1274 = vmatpush1.bf16.msra.mxu0 0
        %1275 = vmatprep.subr.bf16.mxu0 0
        %1276 = vmatpush1.bf16.msra.mxu0 0
        %1277 = vmatprep.subr.bf16.mxu0 0
        %1278 = vmatpush1.bf16.msra.mxu0 0
        %1279 = vmatprep.subr.bf16.mxu0 0
        %1280 = vmatpush1.bf16.msra.mxu0 0
        %1281 = vmatprep.subr.bf16.mxu0 0
        %1282 = vmatpush1.bf16.msra.mxu0 0
        %1283 = vmatprep.subr.bf16.mxu0 0
        %1284 = vmatpush1.bf16.msra.mxu0 0
        %1285 = vmatprep.mubr.bf16.mxu0 0
        %1286 = vmatmul.mubr.bf16.gmra.mrb[0].mxu0 %v1251
        %v1287 = vpop.f32.mrb[0].mxu0
        %v1288 = vadd.f32 0.0, %v1287
        %v1289 = vpop.f32.mrb[0].mxu0
        %v1290 = vpop.f32.mrb[0].mxu0
        %v1291 = vpop.f32.mrb[0].mxu0
        %1292 = vdwg.mxu0
        %v1293 = vadd.f32 %v1247, %v1288
        %v1294 = vxor.u32 %v1293, 2147483648
        %v1295 = vmul.f32 %v1294, 1.442695
        %v1296 = vpow.pop %v1295
        %v1297 = vadd.f32 %v1296, 1.0
        %v1298 = vrcp.pop %v1297
        %v1299 = vmul.f32 1.0, %v1298
        %v1300 = vtanh.pop %v1293
        %v1301 = vld [vmem:[#allocation3] sm:$0x3]
        %v1304 = vunpack.c.l.s4 1983009808
        %v1305 = vunpack.c.0.s8 %v1304
        %v1306 = vlaneseq
        %v1307 = vshrl.u32 %v1306, 7
        %v1308 = vsub.s32 %v1305, %v1307
        %v1309 = vrot.slane %v1301, %v1308
        %1310 = vrot.lane.b32.xlu0 %v1309, 32
        %v1311 = vpop.permute.xlu0 %1310
        %v1313 = vmul.f32 %v1299, %v1311
        %1315 = vrot.lane.b32.xlu0 %v1300, 64
        %v1316 = vpop.permute.xlu0 %1315
        %v1318 = vmul.f32 %v1299, %v1316
        %1320 = vrot.lane.b32.xlu0 %v1318, 32
        %v1321 = vpop.permute.xlu0 %1320
        %v1323 = vadd.f32 %v1313, %v1321
        %v1324 = vtanh.pop %v1323
        %1326 = vrot.lane.b32.xlu0 %v1324, 64
        %v1327 = vpop.permute.xlu0 %1326
        %v1329 = vmul.f32 %v1299, %v1327
        %v1332 = vunpack.c.l.s4 1983009808
        %v1333 = vunpack.c.0.s8 %v1332
        %v1334 = vlaneseq
        %v1335 = vshrl.u32 %v1334, 7
        %v1336 = vsub.s32 %v1333, %v1335
        %v1337 = vrot.slane %v1323, %v1336
        %1338 = vrot.lane.b32.xlu0 %v1337, 96
        %v1339 = vpop.permute.xlu0 %1338
        %1341 = vst.msk [vmem:[#allocation3] sm:$0x3] %vm417, %v1339
        %v1344 = vunpack.c.l.s4 1983009808
        %v1345 = vunpack.c.0.s8 %v1344
        %v1346 = vlaneseq
        %v1347 = vshrl.u32 %v1346, 7
        %v1348 = vsub.s32 %v1345, %v1347
        %v1349 = vrot.slane %v1329, %v1348
        %1350 = vrot.lane.b32.xlu0 %v1349, 32
        %v1351 = vpop.permute.xlu0 %1350
        %1353 = vst.msk [vmem:[#allocation2] sm:$0x3] %vm417, %v1351
        %v1354 = vpack.c.bf16 %v1329, %v1329
        %v1357 = vunpack.c.l.s4 1966171168
        %v1358 = vunpack.c.0.s8 %v1357
        %v1359 = vlaneseq
        %v1360 = vshrl.u32 %v1359, 7
        %v1361 = vsub.s32 %v1358, %v1360
        %v1362 = vrot.slane %v1354, %v1361
        %v1364 = vunpack.c.l.s4 1966171168
        %v1365 = vunpack.c.0.s8 %v1364
        %v1366 = vlaneseq
        %v1367 = vshrl.u32 %v1366, 7
        %v1368 = vsub.s32 %v1365, %v1367
        %v1369 = vrot.slane %v1362, %v1368
        %1370 = vrot.lane.b32.xlu0 %v1369, 32
        %v1371 = vpop.permute.xlu0 %1370
        %s1373 = scalar_lea.vmem %s289, %s1244
        %1374 = vst.msk [vmem:[%s1373] sm:$0x1] %vm451, %v1371
        %s1375 = smul.u32 %s18, 2
        %s1376 = ssub.s32 0, %s1375
        %s1377 = smul.u32 %s17, %s1376
        %s1378 = sadd.s32 %s18, %s1377
        %s1379 = smul.u32 8, %s1378
        %p1380 = scmp.lt.s32.totalorder %s17, 1
        %s1381 = scalar_select %p1380, %s17, 1
        %p1382 = scmp.lt.s32.totalorder %s1379, 7
        %s1383 = scalar_select %p1382, %s1379, 7
        %s1384 = smul.addr %s1381, 8
        %s1385 = sadd.s32 %s1383, %s1384
        %s1386 = scalar_lea.vmem %s2, %s1385
        // Predicated region
        $region74: #{net_forward.6} parent=64 // pred_check
          %p1387 = pneg %p115
        $region75: #{net_forward.6} parent=64 // pred_check_branch
          %1389 = sbr.rel (%p1387) target = $region77
        $region76: #{net_forward.6} parent=64 // pred_region
          %s1390 = smul.u32 %s18, 2
          %s1391 = ssub.s32 0, %s1390
          %s1392 = smul.u32 %s17, %s1391
          %s1393 = sadd.s32 %s18, %s1392
          %s1394 = smul.u32 8, %s1393
        $region77: #{net_forward.6} parent=64 // pred_fallthru
          _
      $region65: #{net_forward.6} parent=5 // pred_fallthru
        _
      %p1395 = scmp.le.s32.totalorder 2, %s8
      // Predicated region
      $region78: #{net_forward.6} parent=5 // pred_check
        %p1396 = pneg %p1395
      $region79: #{net_forward.6} parent=5 // pred_check_branch
        %1398 = sbr.rel (%p1396) target = $region81
      $region80: #{net_forward.6} parent=5 // pred_region
        %s1399 = ssub.s32 %s8, 2
        // Predicated region
        $region82: #{net_forward.6} parent=80 // pred_check
          %p1400 = pneg %p121
        $region83: #{net_forward.6} parent=80 // pred_check_branch
          %1402 = sbr.rel (%p1400) target = $region85
        $region84: #{net_forward.6} parent=80 // pred_region
          %s1403 = smul.u32 %s20, 2
          %s1404 = ssub.s32 0, %s1403
          %s1405 = smul.u32 %s19, %s1404
          %s1406 = sadd.s32 %s20, %s1405
          %s1407 = smul.u32 8, %s1406
          %p1408 = scmp.lt.s32.totalorder %s19, 1
          %s1409 = scalar_select %p1408, %s19, 1
          %p1410 = scmp.lt.s32.totalorder %s1407, 7
          %s1411 = scalar_select %p1410, %s1407, 7
          %s1412 = smul.addr %s1409, 8
          %s1413 = sadd.s32 %s1411, %s1412
          %s1414 = scalar_lea.vmem %s2, %s1413
        $region85: #{net_forward.6} parent=80 // pred_fallthru
          _
      $region81: #{net_forward.6} parent=5 // pred_fallthru
        _
    $region6: #{net_forward.6} parent=1 // loop_footer
      %s12 = sadd.s32 1, %s8
    $region7: #{net_forward.6} parent=1 // loop_footer_branch
      %7 = sbr.rel target = $region3
    $region8: #{net_forward.6} parent=1 // loop_exit
      _

</llo_original>
